<compile_context>
chip_gen: v7x
topology: tpu7x:2x2x1
jax: 0.10.0
libtpu: 0.0.40
codegen_flags: <defaults>
</compile_context>

<pallas_src>
import functools
import math

import jax
import jax.numpy as jnp
from jax.experimental import pallas as pl
from jax.experimental.pallas import tpu as pltpu


def _round_up(x, m):
    return (x + m - 1) // m * m


def _cross_attn_kernel(chi_ref, eng_ref, wq_ref, wk_ref, wv_ref, out_ref,
                       q_scr, m_scr, l_scr, acc_scr, *, head_dim):
    # chi_ref: (Bt, Sq, E)    eng_ref: (Bt, Skt, E)
    # wq/wk/wv_ref: (E, Hp) bf16, zero-padded from (E, H)  (Hp multiple of 128)
    # out_ref: (Bt, Sq, Hp)
    # scratch: q_scr (Bt,Sq,Hp) bf16, m/l (Bt,Sq,1) f32, acc (Bt,Sq,Hp) f32
    ki = pl.program_id(1)
    Bt, Sq, E = chi_ref.shape
    _, Skt, _ = eng_ref.shape
    Hp = wq_ref.shape[1]

    # --- Per-batch-tile init: project Q once, reset online-softmax state. ---
    @pl.when(ki == 0)
    def _():
        chi2d = chi_ref[...].reshape(Bt * Sq, E).astype(jnp.bfloat16)
        q = jnp.dot(chi2d, wq_ref[...], preferred_element_type=jnp.float32)
        q_scr[...] = q.reshape(Bt, Sq, Hp).astype(jnp.bfloat16)
        m_scr[...] = jnp.full_like(m_scr, -jnp.inf)
        l_scr[...] = jnp.zeros_like(l_scr)
        acc_scr[...] = jnp.zeros_like(acc_scr)

    # --- K / V projections for this key tile (two separate lane-dense
    #     matmuls; no sub-128-lane slicing). Batch folded into the M dim. ---
    eng2d = eng_ref[...].reshape(Bt * Skt, E).astype(jnp.bfloat16)
    k = jnp.dot(eng2d, wk_ref[...], preferred_element_type=jnp.float32)
    v = jnp.dot(eng2d, wv_ref[...], preferred_element_type=jnp.float32)
    k3 = k.reshape(Bt, Skt, Hp).astype(jnp.bfloat16)
    v3 = v.reshape(Bt, Skt, Hp).astype(jnp.bfloat16)

    # --- Scaled scores for this key tile. Padded head columns of Q/K are
    #     zero, so they do not perturb the scores.
    # TODO(synk): at large Hp check the bqh,bkh->bqk lowering with
    # pl.lower_as_mlir for a repeated per-batch K relayout and pre-transpose
    # K once per step if present.
    scale = 1.0 / math.sqrt(head_dim)
    s = jnp.einsum("bqh,bkh->bqk", q_scr[...], k3,
                   preferred_element_type=jnp.float32) * scale   # (Bt,Sq,Skt)

    # --- Online softmax update (flash-style). ---
    m_prev = m_scr[...]
    m_new = jnp.maximum(m_prev, jnp.max(s, axis=-1, keepdims=True))
    alpha = jnp.exp(m_prev - m_new)
    p = jnp.exp(s - m_new)
    l_scr[...] = alpha * l_scr[...] + jnp.sum(p, axis=-1, keepdims=True)
    acc_scr[...] = alpha * acc_scr[...] + jnp.einsum(
        "bqk,bkh->bqh", p.astype(jnp.bfloat16), v3,
        preferred_element_type=jnp.float32)
    m_scr[...] = m_new

    # --- Finalize: exact division (denominator is tiny; off critical path). --
    @pl.when(ki == pl.num_programs(1) - 1)
    def _():
        out_ref[...] = (acc_scr[...] / l_scr[...]).astype(out_ref.dtype)


def encoder_decoder_interactive(batch_eng, batch_chi, w_q, w_k, w_v,
                                *, num_batch_tiles=None, max_k_tile=512):
    """Cross attention: Q from batch_chi, K/V from batch_eng.

    batch_eng: (B, Sk, E)   batch_chi: (B, Sq, E)
    w_q, w_k, w_v: (H, E)   (PyTorch nn.Linear weight layout, bias=False)
    returns: (B, Sq, H)
    """
    B, Sk, E = batch_eng.shape
    Bc, Sq, Ec = batch_chi.shape
    assert Bc == B and Ec == E
    H, Ew = w_q.shape
    assert Ew == E and w_k.shape == (H, E) and w_v.shape == (H, E)

    # Dtype-aware sublane guard: the in-kernel (Bt,S,E)->(Bt*S,E) flatten is
    # layout-free only when S is a multiple of the sublane tile.
    itemsize = jnp.dtype(batch_chi.dtype).itemsize
    sub = {4: 8, 2: 16, 1: 32}.get(itemsize, 8)
    assert Sq % sub == 0 and Sk % sub == 0, (
        "pad sequence lengths to a multiple of the sublane tile for this dtype")

    # Lane-dense projection / output width.
    Hp = _round_up(max(H, 128), 128)

    # Per-generation VMEM budget (explicit, above the scoped defaults).
    try:
        vmem_cap = pltpu.get_tpu_info().vmem_capacity_bytes
    except Exception:  # no TPU info available at trace time
        vmem_cap = 64 << 20
    vmem_limit = int(vmem_cap * 3 // 4)

    # Key-axis tile (flash-style); full Sk when it already fits comfortably.
    if Sk <= max_k_tile:
        Skt = Sk
    else:
        Skt = Sk
        for t in range(max_k_tile, sub - 1, -1):
            if Sk % t == 0 and t % sub == 0:
                Skt = t
                break
    nk = Sk // Skt

    # Batch tiling: smallest number of grid steps whose (double-buffered)
    # working set fits the VMEM budget. For small problems this is 1 step,
    # avoiding per-step pipeline overhead on single-TC chips (v5e/v6e).
    def _fits(bt):
        weights = 3 * E * Hp * 2                                   # bf16 weights
        in_bytes = 2 * (bt * Sq * E + bt * Skt * E) * itemsize     # 2x buffered inputs
        out_bytes = 2 * bt * Sq * Hp * itemsize                    # 2x buffered output
        scratch = bt * Sq * (Hp * 4 + Hp * 2 + 2 * 4)              # acc f32, q bf16, m+l
        return weights + in_bytes + out_bytes + scratch <= vmem_limit

    if num_batch_tiles is None or num_batch_tiles < 1 or B % num_batch_tiles != 0:
        num_batch_tiles = B
        for t in range(1, B + 1):
            if B % t == 0 and _fits(B // t):
                num_batch_tiles = t
                break
    Bt = B // num_batch_tiles

    # One-time weight prep: transpose to (E, H), zero-pad to (E, Hp), bf16.
    def _prep(w):
        wt = w.T.astype(jnp.bfloat16)
        if Hp != H:
            wt = jnp.pad(wt, ((0, 0), (0, Hp - H)))
        return wt

    wq_t, wk_t, wv_t = _prep(w_q), _prep(w_k), _prep(w_v)

    kernel = functools.partial(_cross_attn_kernel, head_dim=H)

    # TODO(synk): on v7x, shard the batch-tile axis across the two TensorCores
    # with pltpu.CORE_PARALLEL (or pl.core_map) when num_batch_tiles > 1.
    out_padded = pl.pallas_call(
        kernel,
        out_shape=jax.ShapeDtypeStruct((B, Sq, Hp), batch_chi.dtype),
        grid_spec=pltpu.PrefetchScalarGridSpec(
            num_scalar_prefetch=0,
            grid=(num_batch_tiles, nk),
            in_specs=[
                pl.BlockSpec((Bt, Sq, E), lambda i, k: (i, 0, 0)),    # batch_chi
                pl.BlockSpec((Bt, Skt, E), lambda i, k: (i, k, 0)),   # batch_eng (K tile)
                pl.BlockSpec((E, Hp), lambda i, k: (0, 0)),           # W_Q^T (padded)
                pl.BlockSpec((E, Hp), lambda i, k: (0, 0)),           # W_K^T (padded)
                pl.BlockSpec((E, Hp), lambda i, k: (0, 0)),           # W_V^T (padded)
            ],
            out_specs=pl.BlockSpec((Bt, Sq, Hp), lambda i, k: (i, 0, 0)),
            scratch_shapes=[
                pltpu.VMEM((Bt, Sq, Hp), jnp.bfloat16),   # Q (projected once per batch tile)
                pltpu.VMEM((Bt, Sq, 1), jnp.float32),     # running max  m
                pltpu.VMEM((Bt, Sq, 1), jnp.float32),     # running sum  l
                pltpu.VMEM((Bt, Sq, Hp), jnp.float32),    # output accumulator
            ],
        ),
        compiler_params=pltpu.CompilerParams(
            dimension_semantics=("parallel", "arbitrary"),
            vmem_limit_bytes=vmem_limit),
    )(batch_chi, batch_eng, wq_t, wk_t, wv_t)

    return out_padded[:, :, :H] if Hp != H else out_padded


def _reference(batch_eng, batch_chi, w_q, w_k, w_v):
    q = batch_chi @ w_q.T
    k = batch_eng @ w_k.T
    v = batch_eng @ w_v.T
    score = q @ jnp.swapaxes(k, -1, -2) / math.sqrt(w_q.shape[0])
    score = jax.nn.softmax(score, axis=-1)
    return score @ v


if __name__ == "__main__":
    # Small shapes consistent with the module's forward.
    B = 8          # batch
    Sq = 8         # chinese (decoder) sequence length
    Sk = 16        # english (encoder) sequence length
    E = 32         # embedding_nums
    H = 32         # head_embedding_nums

    key = jax.random.PRNGKey(0)
    k_eng, k_chi, k_wq, k_wk, k_wv = jax.random.split(key, 5)

    batch_eng = jax.random.normal(k_eng, (B, Sk, E), dtype=jnp.float32)
    batch_chi = jax.random.normal(k_chi, (B, Sq, E), dtype=jnp.float32)

    # Deterministic nn.Linear-style init: uniform(-1/sqrt(E), 1/sqrt(E)).
    bound = 1.0 / math.sqrt(E)
    w_q = jax.random.uniform(k_wq, (H, E), jnp.float32, -bound, bound)
    w_k = jax.random.uniform(k_wk, (H, E), jnp.float32, -bound, bound)
    w_v = jax.random.uniform(k_wv, (H, E), jnp.float32, -bound, bound)

    out = encoder_decoder_interactive(batch_eng, batch_chi, w_q, w_k, w_v)
    out = jax.block_until_ready(out)

    ref = _reference(batch_eng, batch_chi, w_q, w_k, w_v)
    assert out.shape == (B, Sq, H)
    # Tolerance covers the bf16 MXU operands (f32 accumulation throughout).
    assert jnp.allclose(out, ref, atol=2e-2, rtol=2e-2), float(
        jnp.max(jnp.abs(out - ref)))

    print("KERNEL_OK")
</pallas_src>

<mosaic_0001>
module attributes {stable_mosaic.version = 11 : i64} {
  func.func @_cross_attn_kernel(%arg0: i32, %arg1: i32, %arg2: memref<8x8x32xf32, #tpu.memory_space<vmem>>, %arg3: memref<8x16x32xf32, #tpu.memory_space<vmem>>, %arg4: memref<32x128xbf16, #tpu.memory_space<vmem>>, %arg5: memref<32x128xbf16, #tpu.memory_space<vmem>>, %arg6: memref<32x128xbf16, #tpu.memory_space<vmem>>, %arg7: memref<8x8x128xf32, #tpu.memory_space<vmem>>, %arg8: memref<8x8x128xbf16, #tpu.memory_space<vmem>>, %arg9: memref<8x8x1xf32, #tpu.memory_space<vmem>>, %arg10: memref<8x8x1xf32, #tpu.memory_space<vmem>>, %arg11: memref<8x8x128xf32, #tpu.memory_space<vmem>>) attributes {dimension_semantics = [#tpu.dimension_semantics<parallel>, #tpu.dimension_semantics<arbitrary>], iteration_bounds = array<i64: 1, 1>, scalar_prefetch = 0 : i64, scratch_operands = 4 : i64, tpu.core_type = #tpu.core_type<tc>, window_params = [{transform_indices = @transform_0, window_bounds = array<i64: 8, 8, 32>}, {transform_indices = @transform_1, window_bounds = array<i64: 8, 16, 32>}, {pipeline_mode = #tpu.pipeline_mode<synchronous>, transform_indices = @transform_2, window_bounds = array<i64: 32, 128>}, {pipeline_mode = #tpu.pipeline_mode<synchronous>, transform_indices = @transform_3, window_bounds = array<i64: 32, 128>}, {pipeline_mode = #tpu.pipeline_mode<synchronous>, transform_indices = @transform_4, window_bounds = array<i64: 32, 128>}, {transform_indices = @transform_5, window_bounds = array<i64: 8, 8, 128>}]} {
    %c0_i32 = arith.constant 0 : i32
    %0 = arith.cmpi eq, %arg1, %c0_i32 : i32
    %1 = arith.extui %0 : i1 to i32
    %c0_i32_0 = arith.constant 0 : i32
    %2 = arith.cmpi ne, %1, %c0_i32_0 : i32
    scf.if %2 {
      %c0_36 = arith.constant 0 : index
      %c0_37 = arith.constant 0 : index
      %c0_38 = arith.constant 0 : index
      %44 = vector.load %arg2[%c0_36, %c0_37, %c0_38] : memref<8x8x32xf32, #tpu.memory_space<vmem>>, vector<8x8x32xf32>
      %45 = vector.shape_cast %44 : vector<8x8x32xf32> to vector<64x32xf32>
      %46 = arith.truncf %45 : vector<64x32xf32> to vector<64x32xbf16>
      %c0_39 = arith.constant 0 : index
      %c0_40 = arith.constant 0 : index
      %47 = vector.load %arg4[%c0_39, %c0_40] : memref<32x128xbf16, #tpu.memory_space<vmem>>, vector<32x128xbf16>
      %cst_41 = arith.constant dense<0.000000e+00> : vector<64x128xf32>
      %48 = tpu.matmul %46, %47, %cst_41 {dimension_numbers = #tpu.dot_dimension_numbers<[1], [0], [0], [1], [0, 0, 1, 1], [], []>} : vector<64x32xbf16>, vector<32x128xbf16>, vector<64x128xf32> -> vector<64x128xf32>
      %49 = vector.shape_cast %48 : vector<64x128xf32> to vector<8x8x128xf32>
      %50 = arith.truncf %49 : vector<8x8x128xf32> to vector<8x8x128xbf16>
      %c0_42 = arith.constant 0 : index
      %c0_43 = arith.constant 0 : index
      %c0_44 = arith.constant 0 : index
      %51 = vector.load %arg8[%c0_42, %c0_43, %c0_44] : memref<8x8x128xbf16, #tpu.memory_space<vmem>>, vector<8x8x128xbf16>
      tpu.vector_store %arg8[%c0_42, %c0_43, %c0_44], %50 {strides = array<i32>} : memref<8x8x128xbf16, #tpu.memory_space<vmem>>, vector<8x8x128xbf16>,
      %cst_45 = arith.constant 0xFF800000 : f32
      %52 = vector.broadcast %cst_45 : f32 to vector<8x8x1xf32>
      %c0_46 = arith.constant 0 : index
      %c0_47 = arith.constant 0 : index
      %c0_48 = arith.constant 0 : index
      %53 = vector.load %arg9[%c0_46, %c0_47, %c0_48] : memref<8x8x1xf32, #tpu.memory_space<vmem>>, vector<8x8x1xf32>
      tpu.vector_store %arg9[%c0_46, %c0_47, %c0_48], %52 {strides = array<i32>} : memref<8x8x1xf32, #tpu.memory_space<vmem>>, vector<8x8x1xf32>,
      %cst_49 = arith.constant 0.000000e+00 : f32
      %54 = vector.broadcast %cst_49 : f32 to vector<8x8x1xf32>
      %c0_50 = arith.constant 0 : index
      %c0_51 = arith.constant 0 : index
      %c0_52 = arith.constant 0 : index
      %55 = vector.load %arg10[%c0_50, %c0_51, %c0_52] : memref<8x8x1xf32, #tpu.memory_space<vmem>>, vector<8x8x1xf32>
      tpu.vector_store %arg10[%c0_50, %c0_51, %c0_52], %54 {strides = array<i32>} : memref<8x8x1xf32, #tpu.memory_space<vmem>>, vector<8x8x1xf32>,
      %cst_53 = arith.constant 0.000000e+00 : f32
      %56 = vector.broadcast %cst_53 : f32 to vector<8x8x128xf32>
      %c0_54 = arith.constant 0 : index
      %c0_55 = arith.constant 0 : index
      %c0_56 = arith.constant 0 : index
      %57 = vector.load %arg11[%c0_54, %c0_55, %c0_56] : memref<8x8x128xf32, #tpu.memory_space<vmem>>, vector<8x8x128xf32>
      tpu.vector_store %arg11[%c0_54, %c0_55, %c0_56], %56 {strides = array<i32>} : memref<8x8x128xf32, #tpu.memory_space<vmem>>, vector<8x8x128xf32>,
    } else {
    }
    %c0 = arith.constant 0 : index
    %c0_1 = arith.constant 0 : index
    %c0_2 = arith.constant 0 : index
    %3 = vector.load %arg3[%c0, %c0_1, %c0_2] : memref<8x16x32xf32, #tpu.memory_space<vmem>>, vector<8x16x32xf32>
    %4 = vector.shape_cast %3 : vector<8x16x32xf32> to vector<128x32xf32>
    %5 = arith.truncf %4 : vector<128x32xf32> to vector<128x32xbf16>
    %c0_3 = arith.constant 0 : index
    %c0_4 = arith.constant 0 : index
    %6 = vector.load %arg5[%c0_3, %c0_4] : memref<32x128xbf16, #tpu.memory_space<vmem>>, vector<32x128xbf16>
    %cst = arith.constant dense<0.000000e+00> : vector<128x128xf32>
    %7 = tpu.matmul %5, %6, %cst {dimension_numbers = #tpu.dot_dimension_numbers<[1], [0], [0], [1], [0, 0, 1, 1], [], []>} : vector<128x32xbf16>, vector<32x128xbf16>, vector<128x128xf32> -> vector<128x128xf32>
    %c0_5 = arith.constant 0 : index
    %c0_6 = arith.constant 0 : index
    %8 = vector.load %arg6[%c0_5, %c0_6] : memref<32x128xbf16, #tpu.memory_space<vmem>>, vector<32x128xbf16>
    %cst_7 = arith.constant dense<0.000000e+00> : vector<128x128xf32>
    %9 = tpu.matmul %5, %8, %cst_7 {dimension_numbers = #tpu.dot_dimension_numbers<[1], [0], [0], [1], [0, 0, 1, 1], [], []>} : vector<128x32xbf16>, vector<32x128xbf16>, vector<128x128xf32> -> vector<128x128xf32>
    %10 = vector.shape_cast %7 : vector<128x128xf32> to vector<8x16x128xf32>
    %11 = arith.truncf %10 : vector<8x16x128xf32> to vector<8x16x128xbf16>
    %12 = vector.shape_cast %9 : vector<128x128xf32> to vector<8x16x128xf32>
    %13 = arith.truncf %12 : vector<8x16x128xf32> to vector<8x16x128xbf16>
    %c0_8 = arith.constant 0 : index
    %c0_9 = arith.constant 0 : index
    %c0_10 = arith.constant 0 : index
    %14 = vector.load %arg8[%c0_8, %c0_9, %c0_10] : memref<8x8x128xbf16, #tpu.memory_space<vmem>>, vector<8x8x128xbf16>
    "tpu.trace_start"() <{level = 10 : i32, message = "bqh,bkh->bqk"}> : () -> ()
    %cst_11 = arith.constant dense<0.000000e+00> : vector<8x8x16xf32>
    %15 = tpu.matmul %14, %11, %cst_11 {dimension_numbers = #tpu.dot_dimension_numbers<[2], [2], [1], [1], [0, 0, 0, 1, 1, 1], [0], [0]>} : vector<8x8x128xbf16>, vector<8x16x128xbf16>, vector<8x8x16xf32> -> vector<8x8x16xf32>
    "tpu.trace_stop"() : () -> ()
    %cst_12 = arith.constant 0.176776692 : f32
    %16 = vector.broadcast %cst_12 : f32 to vector<8x8x16xf32>
    %17 = arith.mulf %15, %16 : vector<8x8x16xf32>
    %c0_13 = arith.constant 0 : index
    %c0_14 = arith.constant 0 : index
    %c0_15 = arith.constant 0 : index
    %18 = vector.load %arg9[%c0_13, %c0_14, %c0_15] : memref<8x8x1xf32, #tpu.memory_space<vmem>>, vector<8x8x1xf32>
    %cst_16 = arith.constant dense<0xFF800000> : vector<8x8xf32>
    %19 = vector.multi_reduction <maximumf>, %17, %cst_16 [2] : vector<8x8x16xf32> to vector<8x8xf32>
    %20 = vector.shape_cast %19 : vector<8x8xf32> to vector<8x8x1xf32>
    %21 = arith.maximumf %18, %20 : vector<8x8x1xf32>
    %22 = arith.subf %18, %21 : vector<8x8x1xf32>
    %23 = math.exp %22 : vector<8x8x1xf32>
    %24 = vector.broadcast %21 : vector<8x8x1xf32> to vector<8x8x16xf32>
    %25 = arith.subf %17, %24 : vector<8x8x16xf32>
    %26 = math.exp %25 : vector<8x8x16xf32>
    %c0_17 = arith.constant 0 : index
    %c0_18 = arith.constant 0 : index
    %c0_19 = arith.constant 0 : index
    %27 = vector.load %arg10[%c0_17, %c0_18, %c0_19] : memref<8x8x1xf32, #tpu.memory_space<vmem>>, vector<8x8x1xf32>
    %28 = arith.mulf %23, %27 : vector<8x8x1xf32>
    %cst_20 = arith.constant dense<0.000000e+00> : vector<8x8xf32>
    %29 = vector.multi_reduction <add>, %26, %cst_20 [2] : vector<8x8x16xf32> to vector<8x8xf32>
    %30 = vector.shape_cast %29 : vector<8x8xf32> to vector<8x8x1xf32>
    %31 = arith.addf %28, %30 : vector<8x8x1xf32>
    %c0_21 = arith.constant 0 : index
    %c0_22 = arith.constant 0 : index
    %c0_23 = arith.constant 0 : index
    %32 = vector.load %arg10[%c0_21, %c0_22, %c0_23] : memref<8x8x1xf32, #tpu.memory_space<vmem>>, vector<8x8x1xf32>
    tpu.vector_store %arg10[%c0_21, %c0_22, %c0_23], %31 {strides = array<i32>} : memref<8x8x1xf32, #tpu.memory_space<vmem>>, vector<8x8x1xf32>,
    %c0_24 = arith.constant 0 : index
    %c0_25 = arith.constant 0 : index
    %c0_26 = arith.constant 0 : index
    %33 = vector.load %arg11[%c0_24, %c0_25, %c0_26] : memref<8x8x128xf32, #tpu.memory_space<vmem>>, vector<8x8x128xf32>
    %34 = vector.broadcast %23 : vector<8x8x1xf32> to vector<8x8x128xf32>
    %35 = arith.mulf %34, %33 : vector<8x8x128xf32>
    %36 = arith.truncf %26 : vector<8x8x16xf32> to vector<8x8x16xbf16>
    "tpu.trace_start"() <{level = 10 : i32, message = "bqk,bkh->bqh"}> : () -> ()
    %cst_27 = arith.constant dense<0.000000e+00> : vector<8x8x128xf32>
    %37 = tpu.matmul %36, %13, %cst_27 {dimension_numbers = #tpu.dot_dimension_numbers<[2], [1], [1], [2], [0, 0, 0, 1, 1, 2], [0], [0]>} : vector<8x8x16xbf16>, vector<8x16x128xbf16>, vector<8x8x128xf32> -> vector<8x8x128xf32>
    "tpu.trace_stop"() : () -> ()
    %38 = arith.addf %35, %37 : vector<8x8x128xf32>
    %c0_28 = arith.constant 0 : index
    %c0_29 = arith.constant 0 : index
    %c0_30 = arith.constant 0 : index
    %39 = vector.load %arg11[%c0_28, %c0_29, %c0_30] : memref<8x8x128xf32, #tpu.memory_space<vmem>>, vector<8x8x128xf32>
    tpu.vector_store %arg11[%c0_28, %c0_29, %c0_30], %38 {strides = array<i32>} : memref<8x8x128xf32, #tpu.memory_space<vmem>>, vector<8x8x128xf32>,
    %c0_31 = arith.constant 0 : index
    %c0_32 = arith.constant 0 : index
    %c0_33 = arith.constant 0 : index
    %40 = vector.load %arg9[%c0_31, %c0_32, %c0_33] : memref<8x8x1xf32, #tpu.memory_space<vmem>>, vector<8x8x1xf32>
    tpu.vector_store %arg9[%c0_31, %c0_32, %c0_33], %21 {strides = array<i32>} : memref<8x8x1xf32, #tpu.memory_space<vmem>>, vector<8x8x1xf32>,
    %c0_i32_34 = arith.constant 0 : i32
    %41 = arith.cmpi eq, %arg1, %c0_i32_34 : i32
    %42 = arith.extui %41 : i1 to i32
    %c0_i32_35 = arith.constant 0 : i32
    %43 = arith.cmpi ne, %42, %c0_i32_35 : i32
    scf.if %43 {
      %c0_36 = arith.constant 0 : index
      %c0_37 = arith.constant 0 : index
      %c0_38 = arith.constant 0 : index
      %44 = vector.load %arg11[%c0_36, %c0_37, %c0_38] : memref<8x8x128xf32, #tpu.memory_space<vmem>>, vector<8x8x128xf32>
      %c0_39 = arith.constant 0 : index
      %c0_40 = arith.constant 0 : index
      %c0_41 = arith.constant 0 : index
      %45 = vector.load %arg10[%c0_39, %c0_40, %c0_41] : memref<8x8x1xf32, #tpu.memory_space<vmem>>, vector<8x8x1xf32>
      %46 = vector.broadcast %45 : vector<8x8x1xf32> to vector<8x8x128xf32>
      %47 = arith.divf %44, %46 : vector<8x8x128xf32>
      %c0_42 = arith.constant 0 : index
      %c0_43 = arith.constant 0 : index
      %c0_44 = arith.constant 0 : index
      %48 = vector.load %arg7[%c0_42, %c0_43, %c0_44] : memref<8x8x128xf32, #tpu.memory_space<vmem>>, vector<8x8x128xf32>
      tpu.vector_store %arg7[%c0_42, %c0_43, %c0_44], %47 {strides = array<i32>} : memref<8x8x128xf32, #tpu.memory_space<vmem>>, vector<8x8x128xf32>,
    } else {
    }
    return
  }
  func.func @transform_0(%arg0: i32, %arg1: i32) -> (i32, i32, i32) {
    %c0_i32 = arith.constant 0 : i32
    %c0_i32_0 = arith.constant 0 : i32
    %c0_i32_1 = arith.constant 0 : i32
    return %arg0, %c0_i32, %c0_i32_0 : i32, i32, i32
  }
  func.func @transform_1(%arg0: i32, %arg1: i32) -> (i32, i32, i32) {
    %c0_i32 = arith.constant 0 : i32
    %c0_i32_0 = arith.constant 0 : i32
    return %arg0, %arg1, %c0_i32 : i32, i32, i32
  }
  func.func @transform_2(%arg0: i32, %arg1: i32) -> (i32, i32) {
    %c0_i32 = arith.constant 0 : i32
    %c0_i32_0 = arith.constant 0 : i32
    %c0_i32_1 = arith.constant 0 : i32
    return %c0_i32, %c0_i32_0 : i32, i32
  }
  func.func @transform_3(%arg0: i32, %arg1: i32) -> (i32, i32) {
    %c0_i32 = arith.constant 0 : i32
    %c0_i32_0 = arith.constant 0 : i32
    %c0_i32_1 = arith.constant 0 : i32
    return %c0_i32, %c0_i32_0 : i32, i32
  }
  func.func @transform_4(%arg0: i32, %arg1: i32) -> (i32, i32) {
    %c0_i32 = arith.constant 0 : i32
    %c0_i32_0 = arith.constant 0 : i32
    %c0_i32_1 = arith.constant 0 : i32
    return %c0_i32, %c0_i32_0 : i32, i32
  }
  func.func @transform_5(%arg0: i32, %arg1: i32) -> (i32, i32, i32) {
    %c0_i32 = arith.constant 0 : i32
    %c0_i32_0 = arith.constant 0 : i32
    %c0_i32_1 = arith.constant 0 : i32
    return %arg0, %c0_i32, %c0_i32_0 : i32, i32, i32
  }
}

</mosaic_0001>

<llo_original>
// kernel: tpu_custom_call.1
$region0: #{tpu_custom_call.1}
  #allocation0 [shape = 'u32[]', space=smem, size = 0x4, offset = 0x4, fixed_abs, tag = 'smem constant byte address 0x4 - core index']
  #allocation1 [shape = 'u32[144,128]{1,0:T(1,128)}', space=vmem, size = 0x12000, scoped, tag = 'internal scratch']
  #allocation2 [shape = 'bf16[8,8,128]{2,1,0:T(8,128)(2,1)}', space=vmem, size = 0x4000, scoped, tag = 'scratch operand']
  #allocation3 [shape = 'f32[8,8,1]{2,1,0:T(8,128)}', space=vmem, size = 0x8000, scoped, tag = 'scratch operand']
  #allocation4 [shape = 'f32[8,8,1]{2,1,0:T(8,128)}', space=vmem, size = 0x8000, scoped, tag = 'scratch operand']
  #allocation5 [shape = 'f32[8,8,128]{2,1,0:T(8,128)}', space=vmem, size = 0x8000, scoped, tag = 'scratch operand']
  %s0 = inlined_call_operand.hbm [shape: f32[8,8,32], index: 0, kind: input, shape index: {}]
  %s1 = inlined_call_operand.hbm [shape: f32[8,16,32], index: 1, kind: input, shape index: {}]
  %s2 = inlined_call_operand.hbm [shape: bf16[32,128], index: 2, kind: input, shape index: {}]
  %s3 = inlined_call_operand.hbm [shape: bf16[32,128], index: 3, kind: input, shape index: {}]
  %s4 = inlined_call_operand.hbm [shape: bf16[32,128], index: 4, kind: input, shape index: {}]
  %s5 = inlined_call_operand.hbm [shape: f32[8,8,128], index: 5, kind: output, shape index: {}]
  %s6 = sld [smem:[#allocation0]]
  $region58: #{tpu_custom_call.1} parent=0
    _
  %s8 = ssub.s32 1, %s6
  %s9 = scalar_select 0, %s8, %s6
  $region1: #{tpu_custom_call.1} parent=0
    #allocation6 [shape = 'u8[32768]{0}', space=vmem, size = 0x8000, scoped, tag = 'input window, operand 0, single buffered']
    #allocation7 [shape = 's32[1]{0}', space=sflag, size = 0x4, scoped, tag = 'scoped memory for tpu_custom_call.1']
    #allocation8 [shape = 's32[1]{0}', space=sflag, size = 0x4, scoped, tag = 'scoped memory for tpu_custom_call.1']
    #allocation9 [shape = 'u8[65536]{0}', space=vmem, size = 0x10000, scoped, tag = 'input window, operand 1, single buffered']
    #allocation10 [shape = 's32[1]{0}', space=sflag, size = 0x4, scoped, tag = 'scoped memory for tpu_custom_call.1']
    #allocation11 [shape = 'u8[8192]{0}', space=vmem, size = 0x2000, scoped, tag = 'input window, operand 2, single buffered']
    #allocation12 [shape = 'u8[8192]{0}', space=vmem, size = 0x2000, scoped, tag = 'input window, operand 3, single buffered']
    #allocation13 [shape = 's32[1]{0}', space=sflag, size = 0x4, scoped, tag = 'scoped memory for tpu_custom_call.1']
    #allocation14 [shape = 'u8[8192]{0}', space=vmem, size = 0x2000, scoped, tag = 'input window, operand 4, single buffered']
    #allocation15 [shape = 'u8[32768]{0}', space=vmem, size = 0x8000, scoped, tag = 'output window, operand 0, single buffered']
    %10 = vsyncpa [#allocation7], 0
    %11 = vsyncpa [#allocation10], 0
    %12 = vsyncpa [#allocation13], 0
    %13 = vsyncpa [#allocation8], 0
    // Predicated region
    $region2: #{tpu_custom_call.1} parent=1 // pred_check
      _
    $region3: #{tpu_custom_call.1} parent=1 // pred_check_branch
      %15 = sbr.rel (0) target = $region5
    $region4: #{tpu_custom_call.1} parent=1 // pred_region
      %s17 = ssub.s32 1024, 1024
      %18 = vsyncadd [#allocation7], %s17
      %s19 = sshll.u32 [#allocation6], 4
      %s20 = int_to_ptr.vmem [resolvable:$true] %s19
      %25 = dma.hbm_to_vmem [thread:$0]  %s0, 1024, %s20, [#allocation7], 128, 128, 8
    $region5: #{tpu_custom_call.1} parent=1 // pred_fallthru
      _
    // Predicated region
    $region6: #{tpu_custom_call.1} parent=1 // pred_check
      _
    $region7: #{tpu_custom_call.1} parent=1 // pred_check_branch
      %27 = sbr.rel (0) target = $region9
    $region8: #{tpu_custom_call.1} parent=1 // pred_region
      %s29 = ssub.s32 2048, 2048
      %30 = vsyncadd [#allocation10], %s29
      %s31 = sshll.u32 [#allocation9], 4
      %s32 = int_to_ptr.vmem [resolvable:$true] %s31
      %37 = dma.hbm_to_vmem [thread:$0]  %s1, 2048, %s32, [#allocation10], 128, 128, 8
    $region9: #{tpu_custom_call.1} parent=1 // pred_fallthru
      _
    // Predicated region
    $region10: #{tpu_custom_call.1} parent=1 // pred_check
      _
    $region11: #{tpu_custom_call.1} parent=1 // pred_check_branch
      %39 = sbr.rel (0) target = $region13
    $region12: #{tpu_custom_call.1} parent=1 // pred_region
      %s41 = ssub.s32 256, 256
      %42 = vsyncadd [#allocation10], %s41
      %s43 = sshll.u32 [#allocation11], 4
      %s44 = int_to_ptr.vmem [resolvable:$true] %s43
      %49 = dma.hbm_to_vmem [thread:$0]  %s2, 256, %s44, [#allocation10], 64, 64, 4
    $region13: #{tpu_custom_call.1} parent=1 // pred_fallthru
      _
    // Predicated region
    $region14: #{tpu_custom_call.1} parent=1 // pred_check
      _
    $region15: #{tpu_custom_call.1} parent=1 // pred_check_branch
      %51 = sbr.rel (0) target = $region17
    $region16: #{tpu_custom_call.1} parent=1 // pred_region
      %s53 = ssub.s32 256, 256
      %54 = vsyncadd [#allocation13], %s53
      %s55 = sshll.u32 [#allocation12], 4
      %s56 = int_to_ptr.vmem [resolvable:$true] %s55
      %61 = dma.hbm_to_vmem [thread:$0]  %s3, 256, %s56, [#allocation13], 64, 64, 4
    $region17: #{tpu_custom_call.1} parent=1 // pred_fallthru
      _
    // Predicated region
    $region18: #{tpu_custom_call.1} parent=1 // pred_check
      _
    $region19: #{tpu_custom_call.1} parent=1 // pred_check_branch
      %63 = sbr.rel (0) target = $region21
    $region20: #{tpu_custom_call.1} parent=1 // pred_region
      %s65 = ssub.s32 256, 256
      %66 = vsyncadd [#allocation13], %s65
      %s67 = sshll.u32 [#allocation14], 4
      %s68 = int_to_ptr.vmem [resolvable:$true] %s67
      %73 = dma.hbm_to_vmem [thread:$0]  %s4, 256, %s68, [#allocation13], 64, 64, 4
    $region21: #{tpu_custom_call.1} parent=1 // pred_fallthru
      _
    // Predicated region
    $region22: #{tpu_custom_call.1} parent=1 // pred_check
      _
    $region23: #{tpu_custom_call.1} parent=1 // pred_check_branch
      %75 = sbr.rel (0) target = $region25
    $region24: #{tpu_custom_call.1} parent=1 // pred_region
      %76 = dma.done [#allocation7], 1024
    $region25: #{tpu_custom_call.1} parent=1 // pred_fallthru
      _
    // Predicated region
    $region26: #{tpu_custom_call.1} parent=1 // pred_check
      _
    $region27: #{tpu_custom_call.1} parent=1 // pred_check_branch
      %78 = sbr.rel (0) target = $region29
    $region28: #{tpu_custom_call.1} parent=1 // pred_region
      %79 = dma.done [#allocation10], 2048
    $region29: #{tpu_custom_call.1} parent=1 // pred_fallthru
      _
    // Predicated region
    $region30: #{tpu_custom_call.1} parent=1 // pred_check
      _
    $region31: #{tpu_custom_call.1} parent=1 // pred_check_branch
      %81 = sbr.rel (0) target = $region33
    $region32: #{tpu_custom_call.1} parent=1 // pred_region
      %82 = dma.done [#allocation10], 256
    $region33: #{tpu_custom_call.1} parent=1 // pred_fallthru
      _
    // Predicated region
    $region34: #{tpu_custom_call.1} parent=1 // pred_check
      _
    $region35: #{tpu_custom_call.1} parent=1 // pred_check_branch
      %84 = sbr.rel (0) target = $region37
    $region36: #{tpu_custom_call.1} parent=1 // pred_region
      %85 = dma.done [#allocation13], 256
    $region37: #{tpu_custom_call.1} parent=1 // pred_fallthru
      _
    // Predicated region
    $region38: #{tpu_custom_call.1} parent=1 // pred_check
      _
    $region39: #{tpu_custom_call.1} parent=1 // pred_check_branch
      %87 = sbr.rel (0) target = $region41
    $region40: #{tpu_custom_call.1} parent=1 // pred_region
      %88 = dma.done [#allocation13], 256
    $region41: #{tpu_custom_call.1} parent=1 // pred_fallthru
      _
    %p90 = scmp.eq.s32.totalorder 0, 0
    // Predicated region
    $region42: #{tpu_custom_call.1} parent=1 // pred_check
      %p91 = pneg %p90
    $region43: #{tpu_custom_call.1} parent=1 // pred_check_branch
      %93 = sbr.rel (%p91) target = $region45
    $region44: #{tpu_custom_call.1} parent=1 // pred_region
      %v94 = vld [vmem:[#allocation6] sm:$0xff]
      %v95 = vld [vmem:[#allocation6 + $0x8] sm:$0xff]
      %v96 = vld [vmem:[#allocation6 + $0x10] sm:$0xff]
      %v97 = vld [vmem:[#allocation6 + $0x18] sm:$0xff]
      %v98 = vld [vmem:[#allocation6 + $0x20] sm:$0xff]
      %v99 = vld [vmem:[#allocation6 + $0x28] sm:$0xff]
      %v100 = vld [vmem:[#allocation6 + $0x30] sm:$0xff]
      %v101 = vld [vmem:[#allocation6 + $0x38] sm:$0xff]
      %v102 = vpack.c.bf16 %v95, %v94
      %v103 = vpack.c.bf16 %v97, %v96
      %v104 = vpack.c.bf16 %v99, %v98
      %v105 = vpack.c.bf16 %v101, %v100
      %v106 = vld [vmem:[#allocation11] sm:$0xf]
      %v107 = vld [vmem:[#allocation11 + $0x4] sm:$0xf]
      %v108 = vld [vmem:[#allocation11 + $0x8] sm:$0xf]
      %v109 = vld [vmem:[#allocation11 + $0xc] sm:$0xf]
      %v114 = vunpack.c.l.b16 %v106
      %v115 = vunpack.c.l.b16 %v107
      %v116 = vunpack.c.l.b16 %v108
      %v117 = vunpack.c.l.b16 %v109
      %v118 = vpack.c.b16 %v115, %v114
      %v119 = vpack.c.b16 %v117, %v116
      %vm122 = vcmask 261120
      %v124 = vsel %vm122, %v102, 0
      %v127 = vsel %vm122, %v103, 0
      %v130 = vsel %vm122, %v104, 0
      %v133 = vsel %vm122, %v105, 0
      %135 = vmatprep.subr.bf16.mxu0 0
      %136 = vmatpush1.bf16.msra.mxu0 %v118
      %137 = vmatprep.subr.bf16.mxu0 0
      %138 = vmatpush1.bf16.msra.mxu0 %v119
      %139 = vmatprep.subr.bf16.mxu0 0
      %140 = vmatpush1.bf16.msra.mxu0 0
      %141 = vmatprep.subr.bf16.mxu0 0
      %142 = vmatpush1.bf16.msra.mxu0 0
      %143 = vmatprep.subr.bf16.mxu0 0
      %144 = vmatpush1.bf16.msra.mxu0 0
      %145 = vmatprep.subr.bf16.mxu0 0
      %146 = vmatpush1.bf16.msra.mxu0 0
      %147 = vmatprep.subr.bf16.mxu0 0
      %148 = vmatpush1.bf16.msra.mxu0 0
      %149 = vmatprep.subr.bf16.mxu0 0
      %150 = vmatpush1.bf16.msra.mxu0 0
      %151 = vmatprep.subr.bf16.mxu0 0
      %152 = vmatpush1.bf16.msra.mxu0 0
      %153 = vmatprep.subr.bf16.mxu0 0
      %154 = vmatpush1.bf16.msra.mxu0 0
      %155 = vmatprep.subr.bf16.mxu0 0
      %156 = vmatpush1.bf16.msra.mxu0 0
      %157 = vmatprep.subr.bf16.mxu0 0
      %158 = vmatpush1.bf16.msra.mxu0 0
      %159 = vmatprep.subr.bf16.mxu0 0
      %160 = vmatpush1.bf16.msra.mxu0 0
      %161 = vmatprep.subr.bf16.mxu0 0
      %162 = vmatpush1.bf16.msra.mxu0 0
      %163 = vmatprep.subr.bf16.mxu0 0
      %164 = vmatpush1.bf16.msra.mxu0 0
      %165 = vmatprep.subr.bf16.mxu0 0
      %166 = vmatpush1.bf16.msra.mxu0 0
      %167 = vmatprep.mubr.bf16.mxu0 0
      %168 = vmatmul.mubr.bf16.gmra.mrb[0].mxu0 %v124
      %v169 = vpop.f32.mrb[0].mxu0
      %v170 = vadd.f32 0.0, %v169
      %v171 = vpop.f32.mrb[0].mxu0
      %v172 = vpop.f32.mrb[0].mxu0
      %v173 = vadd.f32 0.0, %v172
      %v174 = vpop.f32.mrb[0].mxu0
      %175 = vmatprep.mubr.bf16.mxu0 0
      %176 = vmatmul.mubr.bf16.gmra.mrb[0].mxu0 %v127
      %v177 = vpop.f32.mrb[0].mxu0
      %v178 = vadd.f32 0.0, %v177
      %v179 = vpop.f32.mrb[0].mxu0
      %v180 = vpop.f32.mrb[0].mxu0
      %v181 = vadd.f32 0.0, %v180
      %v182 = vpop.f32.mrb[0].mxu0
      %183 = vmatprep.mubr.bf16.mxu0 0
      %184 = vmatmul.mubr.bf16.gmra.mrb[0].mxu0 %v130
      %v185 = vpop.f32.mrb[0].mxu0
      %v186 = vadd.f32 0.0, %v185
      %v187 = vpop.f32.mrb[0].mxu0
      %v188 = vpop.f32.mrb[0].mxu0
      %v189 = vadd.f32 0.0, %v188
      %v190 = vpop.f32.mrb[0].mxu0
      %191 = vmatprep.mubr.bf16.mxu0 0
      %192 = vmatmul.mubr.bf16.gmra.mrb[0].mxu0 %v133
      %v193 = vpop.f32.mrb[0].mxu0
      %v194 = vadd.f32 0.0, %v193
      %v195 = vpop.f32.mrb[0].mxu0
      %v196 = vpop.f32.mrb[0].mxu0
      %v197 = vadd.f32 0.0, %v196
      %v198 = vpop.f32.mrb[0].mxu0
      %199 = vdwg.mxu0
      %v200 = vpack.c.bf16 %v170, %v170
      %v201 = vpack.c.bf16 %v173, %v173
      %v202 = vpack.c.bf16 %v178, %v178
      %v203 = vpack.c.bf16 %v181, %v181
      %v204 = vpack.c.bf16 %v186, %v186
      %v205 = vpack.c.bf16 %v189, %v189
      %v206 = vpack.c.bf16 %v194, %v194
      %v207 = vpack.c.bf16 %v197, %v197
      %208 = vst [vmem:[#allocation2] sm:$0xf] %v200
      %209 = vst [vmem:[#allocation2 + $0x4] sm:$0xf] %v201
      %210 = vst [vmem:[#allocation2 + $0x8] sm:$0xf] %v202
      %211 = vst [vmem:[#allocation2 + $0xc] sm:$0xf] %v203
      %212 = vst [vmem:[#allocation2 + $0x10] sm:$0xf] %v204
      %213 = vst [vmem:[#allocation2 + $0x14] sm:$0xf] %v205
      %214 = vst [vmem:[#allocation2 + $0x18] sm:$0xf] %v206
      %215 = vst [vmem:[#allocation2 + $0x1c] sm:$0xf] %v207
      %vm216 = vcmask 7168
      %217 = vst.msk [vmem:[#allocation3] sm:$0xff] %vm216, -inf
      %218 = vst.msk [vmem:[#allocation3 + $0x8] sm:$0xff] %vm216, -inf
      %219 = vst.msk [vmem:[#allocation3 + $0x10] sm:$0xff] %vm216, -inf
      %220 = vst.msk [vmem:[#allocation3 + $0x18] sm:$0xff] %vm216, -inf
      %221 = vst.msk [vmem:[#allocation3 + $0x20] sm:$0xff] %vm216, -inf
      %222 = vst.msk [vmem:[#allocation3 + $0x28] sm:$0xff] %vm216, -inf
      %223 = vst.msk [vmem:[#allocation3 + $0x30] sm:$0xff] %vm216, -inf
      %224 = vst.msk [vmem:[#allocation3 + $0x38] sm:$0xff] %vm216, -inf
      %225 = vst.msk [vmem:[#allocation4] sm:$0xff] %vm216, 0.0
      %226 = vst.msk [vmem:[#allocation4 + $0x8] sm:$0xff] %vm216, 0.0
      %227 = vst.msk [vmem:[#allocation4 + $0x10] sm:$0xff] %vm216, 0.0
      %228 = vst.msk [vmem:[#allocation4 + $0x18] sm:$0xff] %vm216, 0.0
      %229 = vst.msk [vmem:[#allocation4 + $0x20] sm:$0xff] %vm216, 0.0
      %230 = vst.msk [vmem:[#allocation4 + $0x28] sm:$0xff] %vm216, 0.0
      %231 = vst.msk [vmem:[#allocation4 + $0x30] sm:$0xff] %vm216, 0.0
      %232 = vst.msk [vmem:[#allocation4 + $0x38] sm:$0xff] %vm216, 0.0
      %233 = vst [vmem:[#allocation5] sm:$0xff] 0.0
      %234 = vst [vmem:[#allocation5 + $0x8] sm:$0xff] 0.0
      %235 = vst [vmem:[#allocation5 + $0x10] sm:$0xff] 0.0
      %236 = vst [vmem:[#allocation5 + $0x18] sm:$0xff] 0.0
      %237 = vst [vmem:[#allocation5 + $0x20] sm:$0xff] 0.0
      %238 = vst [vmem:[#allocation5 + $0x28] sm:$0xff] 0.0
      %239 = vst [vmem:[#allocation5 + $0x30] sm:$0xff] 0.0
      %240 = vst [vmem:[#allocation5 + $0x38] sm:$0xff] 0.0
    $region45: #{tpu_custom_call.1} parent=1 // pred_fallthru
      _
    %v241 = vld [vmem:[#allocation9] sm:$0xff]
    %v242 = vld [vmem:[#allocation9 + $0x8] sm:$0xff]
    %v243 = vld [vmem:[#allocation9 + $0x10] sm:$0xff]
    %v244 = vld [vmem:[#allocation9 + $0x18] sm:$0xff]
    %v245 = vld [vmem:[#allocation9 + $0x20] sm:$0xff]
    %v246 = vld [vmem:[#allocation9 + $0x28] sm:$0xff]
    %v247 = vld [vmem:[#allocation9 + $0x30] sm:$0xff]
    %v248 = vld [vmem:[#allocation9 + $0x38] sm:$0xff]
    %v249 = vld [vmem:[#allocation9 + $0x40] sm:$0xff]
    %v250 = vld [vmem:[#allocation9 + $0x48] sm:$0xff]
    %v251 = vld [vmem:[#allocation9 + $0x50] sm:$0xff]
    %v252 = vld [vmem:[#allocation9 + $0x58] sm:$0xff]
    %v253 = vld [vmem:[#allocation9 + $0x60] sm:$0xff]
    %v254 = vld [vmem:[#allocation9 + $0x68] sm:$0xff]
    %v255 = vld [vmem:[#allocation9 + $0x70] sm:$0xff]
    %v256 = vld [vmem:[#allocation9 + $0x78] sm:$0xff]
    %v257 = vpack.c.bf16 %v242, %v241
    %v258 = vpack.c.bf16 %v244, %v243
    %v259 = vpack.c.bf16 %v246, %v245
    %v260 = vpack.c.bf16 %v248, %v247
    %v261 = vpack.c.bf16 %v250, %v249
    %v262 = vpack.c.bf16 %v252, %v251
    %v263 = vpack.c.bf16 %v254, %v253
    %v264 = vpack.c.bf16 %v256, %v255
    %v265 = vld [vmem:[#allocation12] sm:$0xf]
    %v266 = vld [vmem:[#allocation12 + $0x4] sm:$0xf]
    %v267 = vld [vmem:[#allocation12 + $0x8] sm:$0xf]
    %v268 = vld [vmem:[#allocation12 + $0xc] sm:$0xf]
    %v273 = vunpack.c.l.b16 %v265
    %v274 = vunpack.c.l.b16 %v266
    %v275 = vunpack.c.l.b16 %v267
    %v276 = vunpack.c.l.b16 %v268
    %v277 = vpack.c.b16 %v274, %v273
    %v278 = vpack.c.b16 %v276, %v275
    %vm281 = vcmask 261120
    %v283 = vsel %vm281, %v257, 0
    %v286 = vsel %vm281, %v258, 0
    %v289 = vsel %vm281, %v259, 0
    %v292 = vsel %vm281, %v260, 0
    %v295 = vsel %vm281, %v261, 0
    %v298 = vsel %vm281, %v262, 0
    %v301 = vsel %vm281, %v263, 0
    %v304 = vsel %vm281, %v264, 0
    %306 = vmatprep.subr.bf16.mxu0 0
    %307 = vmatpush1.bf16.msra.mxu0 %v277
    %308 = vmatprep.subr.bf16.mxu0 0
    %309 = vmatpush1.bf16.msra.mxu0 %v278
    %310 = vmatprep.subr.bf16.mxu0 0
    %311 = vmatpush1.bf16.msra.mxu0 0
    %312 = vmatprep.subr.bf16.mxu0 0
    %313 = vmatpush1.bf16.msra.mxu0 0
    %314 = vmatprep.subr.bf16.mxu0 0
    %315 = vmatpush1.bf16.msra.mxu0 0
    %316 = vmatprep.subr.bf16.mxu0 0
    %317 = vmatpush1.bf16.msra.mxu0 0
    %318 = vmatprep.subr.bf16.mxu0 0
    %319 = vmatpush1.bf16.msra.mxu0 0
    %320 = vmatprep.subr.bf16.mxu0 0
    %321 = vmatpush1.bf16.msra.mxu0 0
    %322 = vmatprep.subr.bf16.mxu0 0
    %323 = vmatpush1.bf16.msra.mxu0 0
    %324 = vmatprep.subr.bf16.mxu0 0
    %325 = vmatpush1.bf16.msra.mxu0 0
    %326 = vmatprep.subr.bf16.mxu0 0
    %327 = vmatpush1.bf16.msra.mxu0 0
    %328 = vmatprep.subr.bf16.mxu0 0
    %329 = vmatpush1.bf16.msra.mxu0 0
    %330 = vmatprep.subr.bf16.mxu0 0
    %331 = vmatpush1.bf16.msra.mxu0 0
    %332 = vmatprep.subr.bf16.mxu0 0
    %333 = vmatpush1.bf16.msra.mxu0 0
    %334 = vmatprep.subr.bf16.mxu0 0
    %335 = vmatpush1.bf16.msra.mxu0 0
    %336 = vmatprep.subr.bf16.mxu0 0
    %337 = vmatpush1.bf16.msra.mxu0 0
    %338 = vmatprep.mubr.bf16.mxu0 0
    %339 = vmatmul.mubr.bf16.gmra.mrb[0].mxu0 %v283
    %v340 = vpop.f32.mrb[0].mxu0
    %v341 = vadd.f32 0.0, %v340
    %v342 = vpop.f32.mrb[0].mxu0
    %v343 = vpop.f32.mrb[0].mxu0
    %v344 = vadd.f32 0.0, %v343
    %v345 = vpop.f32.mrb[0].mxu0
    %346 = vmatprep.mubr.bf16.mxu0 0
    %347 = vmatmul.mubr.bf16.gmra.mrb[0].mxu0 %v286
    %v348 = vpop.f32.mrb[0].mxu0
    %v349 = vadd.f32 0.0, %v348
    %v350 = vpop.f32.mrb[0].mxu0
    %v351 = vpop.f32.mrb[0].mxu0
    %v352 = vadd.f32 0.0, %v351
    %v353 = vpop.f32.mrb[0].mxu0
    %354 = vmatprep.mubr.bf16.mxu0 0
    %355 = vmatmul.mubr.bf16.gmra.mrb[0].mxu0 %v289
    %v356 = vpop.f32.mrb[0].mxu0
    %v357 = vadd.f32 0.0, %v356
    %v358 = vpop.f32.mrb[0].mxu0
    %v359 = vpop.f32.mrb[0].mxu0
    %v360 = vadd.f32 0.0, %v359
    %v361 = vpop.f32.mrb[0].mxu0
    %362 = vmatprep.mubr.bf16.mxu0 0
    %363 = vmatmul.mubr.bf16.gmra.mrb[0].mxu0 %v292
    %v364 = vpop.f32.mrb[0].mxu0
    %v365 = vadd.f32 0.0, %v364
    %v366 = vpop.f32.mrb[0].mxu0
    %v367 = vpop.f32.mrb[0].mxu0
    %v368 = vadd.f32 0.0, %v367
    %v369 = vpop.f32.mrb[0].mxu0
    %370 = vmatprep.mubr.bf16.mxu0 0
    %371 = vmatmul.mubr.bf16.gmra.mrb[0].mxu0 %v295
    %v372 = vpop.f32.mrb[0].mxu0
    %v373 = vadd.f32 0.0, %v372
    %v374 = vpop.f32.mrb[0].mxu0
    %v375 = vpop.f32.mrb[0].mxu0
    %v376 = vadd.f32 0.0, %v375
    %v377 = vpop.f32.mrb[0].mxu0
    %378 = vmatprep.mubr.bf16.mxu0 0
    %379 = vmatmul.mubr.bf16.gmra.mrb[0].mxu0 %v298
    %v380 = vpop.f32.mrb[0].mxu0
    %v381 = vadd.f32 0.0, %v380
    %v382 = vpop.f32.mrb[0].mxu0
    %v383 = vpop.f32.mrb[0].mxu0
    %v384 = vadd.f32 0.0, %v383
    %v385 = vpop.f32.mrb[0].mxu0
    %386 = vmatprep.mubr.bf16.mxu0 0
    %387 = vmatmul.mubr.bf16.gmra.mrb[0].mxu0 %v301
    %v388 = vpop.f32.mrb[0].mxu0
    %v389 = vadd.f32 0.0, %v388
    %v390 = vpop.f32.mrb[0].mxu0
    %v391 = vpop.f32.mrb[0].mxu0
    %v392 = vadd.f32 0.0, %v391
    %v393 = vpop.f32.mrb[0].mxu0
    %394 = vmatprep.mubr.bf16.mxu0 0
    %395 = vmatmul.mubr.bf16.gmra.mrb[0].mxu0 %v304
    %v396 = vpop.f32.mrb[0].mxu0
    %v397 = vadd.f32 0.0, %v396
    %v398 = vpop.f32.mrb[0].mxu0
    %v399 = vpop.f32.mrb[0].mxu0
    %v400 = vadd.f32 0.0, %v399
    %v401 = vpop.f32.mrb[0].mxu0
    %402 = vdwg.mxu0
    %v403 = vld [vmem:[#allocation14] sm:$0xf]
    %v404 = vld [vmem:[#allocation14 + $0x4] sm:$0xf]
    %v405 = vld [vmem:[#allocation14 + $0x8] sm:$0xf]
    %v406 = vld [vmem:[#allocation14 + $0xc] sm:$0xf]
    %v411 = vunpack.c.l.b16 %v403
    %v412 = vunpack.c.l.b16 %v404
    %v413 = vunpack.c.l.b16 %v405
    %v414 = vunpack.c.l.b16 %v406
    %v415 = vpack.c.b16 %v412, %v411
    %v416 = vpack.c.b16 %v414, %v413
    %419 = vmatprep.subr.bf16.mxu0 0
    %420 = vmatpush1.bf16.msra.mxu0 %v415
    %421 = vmatprep.subr.bf16.mxu0 0
    %422 = vmatpush1.bf16.msra.mxu0 %v416
    %423 = vmatprep.subr.bf16.mxu0 0
    %424 = vmatpush1.bf16.msra.mxu0 0
    %425 = vmatprep.subr.bf16.mxu0 0
    %426 = vmatpush1.bf16.msra.mxu0 0
    %427 = vmatprep.subr.bf16.mxu0 0
    %428 = vmatpush1.bf16.msra.mxu0 0
    %429 = vmatprep.subr.bf16.mxu0 0
    %430 = vmatpush1.bf16.msra.mxu0 0
    %431 = vmatprep.subr.bf16.mxu0 0
    %432 = vmatpush1.bf16.msra.mxu0 0
    %433 = vmatprep.subr.bf16.mxu0 0
    %434 = vmatpush1.bf16.msra.mxu0 0
    %435 = vmatprep.subr.bf16.mxu0 0
    %436 = vmatpush1.bf16.msra.mxu0 0
    %437 = vmatprep.subr.bf16.mxu0 0
    %438 = vmatpush1.bf16.msra.mxu0 0
    %439 = vmatprep.subr.bf16.mxu0 0
    %440 = vmatpush1.bf16.msra.mxu0 0
    %441 = vmatprep.subr.bf16.mxu0 0
    %442 = vmatpush1.bf16.msra.mxu0 0
    %443 = vmatprep.subr.bf16.mxu0 0
    %444 = vmatpush1.bf16.msra.mxu0 0
    %445 = vmatprep.subr.bf16.mxu0 0
    %446 = vmatpush1.bf16.msra.mxu0 0
    %447 = vmatprep.subr.bf16.mxu0 0
    %448 = vmatpush1.bf16.msra.mxu0 0
    %449 = vmatprep.subr.bf16.mxu0 0
    %450 = vmatpush1.bf16.msra.mxu0 0
    %451 = vmatprep.mubr.bf16.mxu0 0
    %452 = vmatmul.mubr.bf16.gmra.mrb[0].mxu0 %v283
    %v453 = vpop.f32.mrb[0].mxu0
    %v454 = vadd.f32 0.0, %v453
    %v455 = vpop.f32.mrb[0].mxu0
    %v456 = vpop.f32.mrb[0].mxu0
    %v457 = vadd.f32 0.0, %v456
    %v458 = vpop.f32.mrb[0].mxu0
    %459 = vmatprep.mubr.bf16.mxu0 0
    %460 = vmatmul.mubr.bf16.gmra.mrb[0].mxu0 %v286
    %v461 = vpop.f32.mrb[0].mxu0
    %v462 = vadd.f32 0.0, %v461
    %v463 = vpop.f32.mrb[0].mxu0
    %v464 = vpop.f32.mrb[0].mxu0
    %v465 = vadd.f32 0.0, %v464
    %v466 = vpop.f32.mrb[0].mxu0
    %467 = vmatprep.mubr.bf16.mxu0 0
    %468 = vmatmul.mubr.bf16.gmra.mrb[0].mxu0 %v289
    %v469 = vpop.f32.mrb[0].mxu0
    %v470 = vadd.f32 0.0, %v469
    %v471 = vpop.f32.mrb[0].mxu0
    %v472 = vpop.f32.mrb[0].mxu0
    %v473 = vadd.f32 0.0, %v472
    %v474 = vpop.f32.mrb[0].mxu0
    %475 = vmatprep.mubr.bf16.mxu0 0
    %476 = vmatmul.mubr.bf16.gmra.mrb[0].mxu0 %v292
    %v477 = vpop.f32.mrb[0].mxu0
    %v478 = vadd.f32 0.0, %v477
    %v479 = vpop.f32.mrb[0].mxu0
    %v480 = vpop.f32.mrb[0].mxu0
    %v481 = vadd.f32 0.0, %v480
    %v482 = vpop.f32.mrb[0].mxu0
    %483 = vmatprep.mubr.bf16.mxu0 0
    %484 = vmatmul.mubr.bf16.gmra.mrb[0].mxu0 %v295
    %v485 = vpop.f32.mrb[0].mxu0
    %v486 = vadd.f32 0.0, %v485
    %v487 = vpop.f32.mrb[0].mxu0
    %v488 = vpop.f32.mrb[0].mxu0
    %v489 = vadd.f32 0.0, %v488
    %v490 = vpop.f32.mrb[0].mxu0
    %491 = vmatprep.mubr.bf16.mxu0 0
    %492 = vmatmul.mubr.bf16.gmra.mrb[0].mxu0 %v298
    %v493 = vpop.f32.mrb[0].mxu0
    %v494 = vadd.f32 0.0, %v493
    %v495 = vpop.f32.mrb[0].mxu0
    %v496 = vpop.f32.mrb[0].mxu0
    %v497 = vadd.f32 0.0, %v496
    %v498 = vpop.f32.mrb[0].mxu0
    %499 = vmatprep.mubr.bf16.mxu0 0
    %500 = vmatmul.mubr.bf16.gmra.mrb[0].mxu0 %v301
    %v501 = vpop.f32.mrb[0].mxu0
    %v502 = vadd.f32 0.0, %v501
    %v503 = vpop.f32.mrb[0].mxu0
    %v504 = vpop.f32.mrb[0].mxu0
    %v505 = vadd.f32 0.0, %v504
    %v506 = vpop.f32.mrb[0].mxu0
    %507 = vmatprep.mubr.bf16.mxu0 0
    %508 = vmatmul.mubr.bf16.gmra.mrb[0].mxu0 %v304
    %v509 = vpop.f32.mrb[0].mxu0
    %v510 = vadd.f32 0.0, %v509
    %v511 = vpop.f32.mrb[0].mxu0
    %v512 = vpop.f32.mrb[0].mxu0
    %v513 = vadd.f32 0.0, %v512
    %v514 = vpop.f32.mrb[0].mxu0
    %515 = vdwg.mxu0
    %v516 = vpack.c.bf16 %v344, %v341
    %v517 = vpack.c.bf16 %v352, %v349
    %v518 = vpack.c.bf16 %v360, %v357
    %v519 = vpack.c.bf16 %v368, %v365
    %v520 = vpack.c.bf16 %v376, %v373
    %v521 = vpack.c.bf16 %v384, %v381
    %v522 = vpack.c.bf16 %v392, %v389
    %v523 = vpack.c.bf16 %v400, %v397
    %v524 = vpack.c.bf16 %v457, %v454
    %v525 = vpack.c.bf16 %v465, %v462
    %v526 = vpack.c.bf16 %v473, %v470
    %v527 = vpack.c.bf16 %v481, %v478
    %v528 = vpack.c.bf16 %v489, %v486
    %v529 = vpack.c.bf16 %v497, %v494
    %v530 = vpack.c.bf16 %v505, %v502
    %v531 = vpack.c.bf16 %v513, %v510
    %v532 = vld [vmem:[#allocation2] sm:$0xf]
    %v533 = vld [vmem:[#allocation2 + $0x4] sm:$0xf]
    %v534 = vld [vmem:[#allocation2 + $0x8] sm:$0xf]
    %v535 = vld [vmem:[#allocation2 + $0xc] sm:$0xf]
    %v536 = vld [vmem:[#allocation2 + $0x10] sm:$0xf]
    %v537 = vld [vmem:[#allocation2 + $0x14] sm:$0xf]
    %v538 = vld [vmem:[#allocation2 + $0x18] sm:$0xf]
    %v539 = vld [vmem:[#allocation2 + $0x1c] sm:$0xf]
    %540 = vmatprep.subr.bf16.mxu0 0
    %541 = vmatpush1.bf16.xpose.msra.mxu0 %v516
    %542 = vmatprep.subr.bf16.mxu0 0
    %543 = vmatpush1.bf16.xpose.msra.mxu0 0
    %544 = vmatprep.subr.bf16.mxu0 0
    %545 = vmatpush1.bf16.xpose.msra.mxu0 0
    %546 = vmatprep.subr.bf16.mxu0 0
    %547 = vmatpush1.bf16.xpose.msra.mxu0 0
    %548 = vmatprep.subr.bf16.mxu0 0
    %549 = vmatpush1.bf16.xpose.msra.mxu0 0
    %550 = vmatprep.subr.bf16.mxu0 0
    %551 = vmatpush1.bf16.xpose.msra.mxu0 0
    %552 = vmatprep.subr.bf16.mxu0 0
    %553 = vmatpush1.bf16.xpose.msra.mxu0 0
    %554 = vmatprep.subr.bf16.mxu0 0
    %555 = vmatpush1.bf16.xpose.msra.mxu0 0
    %556 = vmatprep.subr.bf16.mxu0 0
    %557 = vmatpush1.bf16.xpose.msra.mxu0 0
    %558 = vmatprep.subr.bf16.mxu0 0
    %559 = vmatpush1.bf16.xpose.msra.mxu0 0
    %560 = vmatprep.subr.bf16.mxu0 0
    %561 = vmatpush1.bf16.xpose.msra.mxu0 0
    %562 = vmatprep.subr.bf16.mxu0 0
    %563 = vmatpush1.bf16.xpose.msra.mxu0 0
    %564 = vmatprep.subr.bf16.mxu0 0
    %565 = vmatpush1.bf16.xpose.msra.mxu0 0
    %566 = vmatprep.subr.bf16.mxu0 0
    %567 = vmatpush1.bf16.xpose.msra.mxu0 0
    %568 = vmatprep.subr.bf16.mxu0 0
    %569 = vmatpush1.bf16.xpose.msra.mxu0 0
    %570 = vmatprep.subr.bf16.mxu0 0
    %571 = vmatpush1.bf16.xpose.msra.mxu0 0
    %572 = vmatprep.mubr.bf16.mxu0 0
    %573 = vmatmul.mubr.bf16.gmra.mrb[0].mxu0 %v532
    %v574 = vpop.f32.mrb[0].mxu0
    %v575 = vadd.f32 0.0, %v574
    %v576 = vpop.f32.mrb[0].mxu0
    %v577 = vpop.f32.mrb[0].mxu0
    %v578 = vpop.f32.mrb[0].mxu0
    %579 = vdwg.mxu0
    %580 = vmatprep.subr.bf16.mxu0 0
    %581 = vmatpush1.bf16.xpose.msra.mxu0 %v517
    %582 = vmatprep.subr.bf16.mxu0 0
    %583 = vmatpush1.bf16.xpose.msra.mxu0 0
    %584 = vmatprep.subr.bf16.mxu0 0
    %585 = vmatpush1.bf16.xpose.msra.mxu0 0
    %586 = vmatprep.subr.bf16.mxu0 0
    %587 = vmatpush1.bf16.xpose.msra.mxu0 0
    %588 = vmatprep.subr.bf16.mxu0 0
    %589 = vmatpush1.bf16.xpose.msra.mxu0 0
    %590 = vmatprep.subr.bf16.mxu0 0
    %591 = vmatpush1.bf16.xpose.msra.mxu0 0
    %592 = vmatprep.subr.bf16.mxu0 0
    %593 = vmatpush1.bf16.xpose.msra.mxu0 0
    %594 = vmatprep.subr.bf16.mxu0 0
    %595 = vmatpush1.bf16.xpose.msra.mxu0 0
    %596 = vmatprep.subr.bf16.mxu0 0
    %597 = vmatpush1.bf16.xpose.msra.mxu0 0
    %598 = vmatprep.subr.bf16.mxu0 0
    %599 = vmatpush1.bf16.xpose.msra.mxu0 0
    %600 = vmatprep.subr.bf16.mxu0 0
    %601 = vmatpush1.bf16.xpose.msra.mxu0 0
    %602 = vmatprep.subr.bf16.mxu0 0
    %603 = vmatpush1.bf16.xpose.msra.mxu0 0
    %604 = vmatprep.subr.bf16.mxu0 0
    %605 = vmatpush1.bf16.xpose.msra.mxu0 0
    %606 = vmatprep.subr.bf16.mxu0 0
    %607 = vmatpush1.bf16.xpose.msra.mxu0 0
    %608 = vmatprep.subr.bf16.mxu0 0
    %609 = vmatpush1.bf16.xpose.msra.mxu0 0
    %610 = vmatprep.subr.bf16.mxu0 0
    %611 = vmatpush1.bf16.xpose.msra.mxu0 0
    %612 = vmatprep.mubr.bf16.mxu0 0
    %613 = vmatmul.mubr.bf16.gmra.mrb[0].mxu0 %v533
    %v614 = vpop.f32.mrb[0].mxu0
    %v615 = vadd.f32 0.0, %v614
    %v616 = vpop.f32.mrb[0].mxu0
    %v617 = vpop.f32.mrb[0].mxu0
    %v618 = vpop.f32.mrb[0].mxu0
    %619 = vdwg.mxu0
    %620 = vmatprep.subr.bf16.mxu0 0
    %621 = vmatpush1.bf16.xpose.msra.mxu0 %v518
    %622 = vmatprep.subr.bf16.mxu0 0
    %623 = vmatpush1.bf16.xpose.msra.mxu0 0
    %624 = vmatprep.subr.bf16.mxu0 0
    %625 = vmatpush1.bf16.xpose.msra.mxu0 0
    %626 = vmatprep.subr.bf16.mxu0 0
    %627 = vmatpush1.bf16.xpose.msra.mxu0 0
    %628 = vmatprep.subr.bf16.mxu0 0
    %629 = vmatpush1.bf16.xpose.msra.mxu0 0
    %630 = vmatprep.subr.bf16.mxu0 0
    %631 = vmatpush1.bf16.xpose.msra.mxu0 0
    %632 = vmatprep.subr.bf16.mxu0 0
    %633 = vmatpush1.bf16.xpose.msra.mxu0 0
    %634 = vmatprep.subr.bf16.mxu0 0
    %635 = vmatpush1.bf16.xpose.msra.mxu0 0
    %636 = vmatprep.subr.bf16.mxu0 0
    %637 = vmatpush1.bf16.xpose.msra.mxu0 0
    %638 = vmatprep.subr.bf16.mxu0 0
    %639 = vmatpush1.bf16.xpose.msra.mxu0 0
    %640 = vmatprep.subr.bf16.mxu0 0
    %641 = vmatpush1.bf16.xpose.msra.mxu0 0
    %642 = vmatprep.subr.bf16.mxu0 0
    %643 = vmatpush1.bf16.xpose.msra.mxu0 0
    %644 = vmatprep.subr.bf16.mxu0 0
    %645 = vmatpush1.bf16.xpose.msra.mxu0 0
    %646 = vmatprep.subr.bf16.mxu0 0
    %647 = vmatpush1.bf16.xpose.msra.mxu0 0
    %648 = vmatprep.subr.bf16.mxu0 0
    %649 = vmatpush1.bf16.xpose.msra.mxu0 0
    %650 = vmatprep.subr.bf16.mxu0 0
    %651 = vmatpush1.bf16.xpose.msra.mxu0 0
    %652 = vmatprep.mubr.bf16.mxu0 0
    %653 = vmatmul.mubr.bf16.gmra.mrb[0].mxu0 %v534
    %v654 = vpop.f32.mrb[0].mxu0
    %v655 = vadd.f32 0.0, %v654
    %v656 = vpop.f32.mrb[0].mxu0
    %v657 = vpop.f32.mrb[0].mxu0
    %v658 = vpop.f32.mrb[0].mxu0
    %659 = vdwg.mxu0
    %660 = vmatprep.subr.bf16.mxu0 0
    %661 = vmatpush1.bf16.xpose.msra.mxu0 %v519
    %662 = vmatprep.subr.bf16.mxu0 0
    %663 = vmatpush1.bf16.xpose.msra.mxu0 0
    %664 = vmatprep.subr.bf16.mxu0 0
    %665 = vmatpush1.bf16.xpose.msra.mxu0 0
    %666 = vmatprep.subr.bf16.mxu0 0
    %667 = vmatpush1.bf16.xpose.msra.mxu0 0
    %668 = vmatprep.subr.bf16.mxu0 0
    %669 = vmatpush1.bf16.xpose.msra.mxu0 0
    %670 = vmatprep.subr.bf16.mxu0 0
    %671 = vmatpush1.bf16.xpose.msra.mxu0 0
    %672 = vmatprep.subr.bf16.mxu0 0
    %673 = vmatpush1.bf16.xpose.msra.mxu0 0
    %674 = vmatprep.subr.bf16.mxu0 0
    %675 = vmatpush1.bf16.xpose.msra.mxu0 0
    %676 = vmatprep.subr.bf16.mxu0 0
    %677 = vmatpush1.bf16.xpose.msra.mxu0 0
    %678 = vmatprep.subr.bf16.mxu0 0
    %679 = vmatpush1.bf16.xpose.msra.mxu0 0
    %680 = vmatprep.subr.bf16.mxu0 0
    %681 = vmatpush1.bf16.xpose.msra.mxu0 0
    %682 = vmatprep.subr.bf16.mxu0 0
    %683 = vmatpush1.bf16.xpose.msra.mxu0 0
    %684 = vmatprep.subr.bf16.mxu0 0
    %685 = vmatpush1.bf16.xpose.msra.mxu0 0
    %686 = vmatprep.subr.bf16.mxu0 0
    %687 = vmatpush1.bf16.xpose.msra.mxu0 0
    %688 = vmatprep.subr.bf16.mxu0 0
    %689 = vmatpush1.bf16.xpose.msra.mxu0 0
    %690 = vmatprep.subr.bf16.mxu0 0
    %691 = vmatpush1.bf16.xpose.msra.mxu0 0
    %692 = vmatprep.mubr.bf16.mxu0 0
    %693 = vmatmul.mubr.bf16.gmra.mrb[0].mxu0 %v535
    %v694 = vpop.f32.mrb[0].mxu0
    %v695 = vadd.f32 0.0, %v694
    %v696 = vpop.f32.mrb[0].mxu0
    %v697 = vpop.f32.mrb[0].mxu0
    %v698 = vpop.f32.mrb[0].mxu0
    %699 = vdwg.mxu0
    %700 = vmatprep.subr.bf16.mxu0 0
    %701 = vmatpush1.bf16.xpose.msra.mxu0 %v520
    %702 = vmatprep.subr.bf16.mxu0 0
    %703 = vmatpush1.bf16.xpose.msra.mxu0 0
    %704 = vmatprep.subr.bf16.mxu0 0
    %705 = vmatpush1.bf16.xpose.msra.mxu0 0
    %706 = vmatprep.subr.bf16.mxu0 0
    %707 = vmatpush1.bf16.xpose.msra.mxu0 0
    %708 = vmatprep.subr.bf16.mxu0 0
    %709 = vmatpush1.bf16.xpose.msra.mxu0 0
    %710 = vmatprep.subr.bf16.mxu0 0
    %711 = vmatpush1.bf16.xpose.msra.mxu0 0
    %712 = vmatprep.subr.bf16.mxu0 0
    %713 = vmatpush1.bf16.xpose.msra.mxu0 0
    %714 = vmatprep.subr.bf16.mxu0 0
    %715 = vmatpush1.bf16.xpose.msra.mxu0 0
    %716 = vmatprep.subr.bf16.mxu0 0
    %717 = vmatpush1.bf16.xpose.msra.mxu0 0
    %718 = vmatprep.subr.bf16.mxu0 0
    %719 = vmatpush1.bf16.xpose.msra.mxu0 0
    %720 = vmatprep.subr.bf16.mxu0 0
    %721 = vmatpush1.bf16.xpose.msra.mxu0 0
    %722 = vmatprep.subr.bf16.mxu0 0
    %723 = vmatpush1.bf16.xpose.msra.mxu0 0
    %724 = vmatprep.subr.bf16.mxu0 0
    %725 = vmatpush1.bf16.xpose.msra.mxu0 0
    %726 = vmatprep.subr.bf16.mxu0 0
    %727 = vmatpush1.bf16.xpose.msra.mxu0 0
    %728 = vmatprep.subr.bf16.mxu0 0
    %729 = vmatpush1.bf16.xpose.msra.mxu0 0
    %730 = vmatprep.subr.bf16.mxu0 0
    %731 = vmatpush1.bf16.xpose.msra.mxu0 0
    %732 = vmatprep.mubr.bf16.mxu0 0
    %733 = vmatmul.mubr.bf16.gmra.mrb[0].mxu0 %v536
    %v734 = vpop.f32.mrb[0].mxu0
    %v735 = vadd.f32 0.0, %v734
    %v736 = vpop.f32.mrb[0].mxu0
    %v737 = vpop.f32.mrb[0].mxu0
    %v738 = vpop.f32.mrb[0].mxu0
    %739 = vdwg.mxu0
    %740 = vmatprep.subr.bf16.mxu0 0
    %741 = vmatpush1.bf16.xpose.msra.mxu0 %v521
    %742 = vmatprep.subr.bf16.mxu0 0
    %743 = vmatpush1.bf16.xpose.msra.mxu0 0
    %744 = vmatprep.subr.bf16.mxu0 0
    %745 = vmatpush1.bf16.xpose.msra.mxu0 0
    %746 = vmatprep.subr.bf16.mxu0 0
    %747 = vmatpush1.bf16.xpose.msra.mxu0 0
    %748 = vmatprep.subr.bf16.mxu0 0
    %749 = vmatpush1.bf16.xpose.msra.mxu0 0
    %750 = vmatprep.subr.bf16.mxu0 0
    %751 = vmatpush1.bf16.xpose.msra.mxu0 0
    %752 = vmatprep.subr.bf16.mxu0 0
    %753 = vmatpush1.bf16.xpose.msra.mxu0 0
    %754 = vmatprep.subr.bf16.mxu0 0
    %755 = vmatpush1.bf16.xpose.msra.mxu0 0
    %756 = vmatprep.subr.bf16.mxu0 0
    %757 = vmatpush1.bf16.xpose.msra.mxu0 0
    %758 = vmatprep.subr.bf16.mxu0 0
    %759 = vmatpush1.bf16.xpose.msra.mxu0 0
    %760 = vmatprep.subr.bf16.mxu0 0
    %761 = vmatpush1.bf16.xpose.msra.mxu0 0
    %762 = vmatprep.subr.bf16.mxu0 0
    %763 = vmatpush1.bf16.xpose.msra.mxu0 0
    %764 = vmatprep.subr.bf16.mxu0 0
    %765 = vmatpush1.bf16.xpose.msra.mxu0 0
    %766 = vmatprep.subr.bf16.mxu0 0
    %767 = vmatpush1.bf16.xpose.msra.mxu0 0
    %768 = vmatprep.subr.bf16.mxu0 0
    %769 = vmatpush1.bf16.xpose.msra.mxu0 0
    %770 = vmatprep.subr.bf16.mxu0 0
    %771 = vmatpush1.bf16.xpose.msra.mxu0 0
    %772 = vmatprep.mubr.bf16.mxu0 0
    %773 = vmatmul.mubr.bf16.gmra.mrb[0].mxu0 %v537
    %v774 = vpop.f32.mrb[0].mxu0
    %v775 = vadd.f32 0.0, %v774
    %v776 = vpop.f32.mrb[0].mxu0
    %v777 = vpop.f32.mrb[0].mxu0
    %v778 = vpop.f32.mrb[0].mxu0
    %779 = vdwg.mxu0
    %780 = vmatprep.subr.bf16.mxu0 0
    %781 = vmatpush1.bf16.xpose.msra.mxu0 %v522
    %782 = vmatprep.subr.bf16.mxu0 0
    %783 = vmatpush1.bf16.xpose.msra.mxu0 0
    %784 = vmatprep.subr.bf16.mxu0 0
    %785 = vmatpush1.bf16.xpose.msra.mxu0 0
    %786 = vmatprep.subr.bf16.mxu0 0
    %787 = vmatpush1.bf16.xpose.msra.mxu0 0
    %788 = vmatprep.subr.bf16.mxu0 0
    %789 = vmatpush1.bf16.xpose.msra.mxu0 0
    %790 = vmatprep.subr.bf16.mxu0 0
    %791 = vmatpush1.bf16.xpose.msra.mxu0 0
    %792 = vmatprep.subr.bf16.mxu0 0
    %793 = vmatpush1.bf16.xpose.msra.mxu0 0
    %794 = vmatprep.subr.bf16.mxu0 0
    %795 = vmatpush1.bf16.xpose.msra.mxu0 0
    %796 = vmatprep.subr.bf16.mxu0 0
    %797 = vmatpush1.bf16.xpose.msra.mxu0 0
    %798 = vmatprep.subr.bf16.mxu0 0
    %799 = vmatpush1.bf16.xpose.msra.mxu0 0
    %800 = vmatprep.subr.bf16.mxu0 0
    %801 = vmatpush1.bf16.xpose.msra.mxu0 0
    %802 = vmatprep.subr.bf16.mxu0 0
    %803 = vmatpush1.bf16.xpose.msra.mxu0 0
    %804 = vmatprep.subr.bf16.mxu0 0
    %805 = vmatpush1.bf16.xpose.msra.mxu0 0
    %806 = vmatprep.subr.bf16.mxu0 0
    %807 = vmatpush1.bf16.xpose.msra.mxu0 0
    %808 = vmatprep.subr.bf16.mxu0 0
    %809 = vmatpush1.bf16.xpose.msra.mxu0 0
    %810 = vmatprep.subr.bf16.mxu0 0
    %811 = vmatpush1.bf16.xpose.msra.mxu0 0
    %812 = vmatprep.mubr.bf16.mxu0 0
    %813 = vmatmul.mubr.bf16.gmra.mrb[0].mxu0 %v538
    %v814 = vpop.f32.mrb[0].mxu0
    %v815 = vadd.f32 0.0, %v814
    %v816 = vpop.f32.mrb[0].mxu0
    %v817 = vpop.f32.mrb[0].mxu0
    %v818 = vpop.f32.mrb[0].mxu0
    %819 = vdwg.mxu0
    %820 = vmatprep.subr.bf16.mxu0 0
    %821 = vmatpush1.bf16.xpose.msra.mxu0 %v523
    %822 = vmatprep.subr.bf16.mxu0 0
    %823 = vmatpush1.bf16.xpose.msra.mxu0 0
    %824 = vmatprep.subr.bf16.mxu0 0
    %825 = vmatpush1.bf16.xpose.msra.mxu0 0
    %826 = vmatprep.subr.bf16.mxu0 0
    %827 = vmatpush1.bf16.xpose.msra.mxu0 0
    %828 = vmatprep.subr.bf16.mxu0 0
    %829 = vmatpush1.bf16.xpose.msra.mxu0 0
    %830 = vmatprep.subr.bf16.mxu0 0
    %831 = vmatpush1.bf16.xpose.msra.mxu0 0
    %832 = vmatprep.subr.bf16.mxu0 0
    %833 = vmatpush1.bf16.xpose.msra.mxu0 0
    %834 = vmatprep.subr.bf16.mxu0 0
    %835 = vmatpush1.bf16.xpose.msra.mxu0 0
    %836 = vmatprep.subr.bf16.mxu0 0
    %837 = vmatpush1.bf16.xpose.msra.mxu0 0
    %838 = vmatprep.subr.bf16.mxu0 0
    %839 = vmatpush1.bf16.xpose.msra.mxu0 0
    %840 = vmatprep.subr.bf16.mxu0 0
    %841 = vmatpush1.bf16.xpose.msra.mxu0 0
    %842 = vmatprep.subr.bf16.mxu0 0
    %843 = vmatpush1.bf16.xpose.msra.mxu0 0
    %844 = vmatprep.subr.bf16.mxu0 0
    %845 = vmatpush1.bf16.xpose.msra.mxu0 0
    %846 = vmatprep.subr.bf16.mxu0 0
    %847 = vmatpush1.bf16.xpose.msra.mxu0 0
    %848 = vmatprep.subr.bf16.mxu0 0
    %849 = vmatpush1.bf16.xpose.msra.mxu0 0
    %850 = vmatprep.subr.bf16.mxu0 0
    %851 = vmatpush1.bf16.xpose.msra.mxu0 0
    %852 = vmatprep.mubr.bf16.mxu0 0
    %853 = vmatmul.mubr.bf16.gmra.mrb[0].mxu0 %v539
    %v854 = vpop.f32.mrb[0].mxu0
    %v855 = vadd.f32 0.0, %v854
    %v856 = vpop.f32.mrb[0].mxu0
    %v857 = vpop.f32.mrb[0].mxu0
    %v858 = vpop.f32.mrb[0].mxu0
    %859 = vdwg.mxu0
    %v860 = vmul.f32 %v575, 0.17677669
    %v861 = vmul.f32 %v615, 0.17677669
    %v862 = vmul.f32 %v655, 0.17677669
    %v863 = vmul.f32 %v695, 0.17677669
    %v864 = vmul.f32 %v735, 0.17677669
    %v865 = vmul.f32 %v775, 0.17677669
    %v866 = vmul.f32 %v815, 0.17677669
    %v867 = vmul.f32 %v855, 0.17677669
    %v868 = vld [vmem:[#allocation3] sm:$0xff]
    %v869 = vld [vmem:[#allocation3 + $0x8] sm:$0xff]
    %v870 = vld [vmem:[#allocation3 + $0x10] sm:$0xff]
    %v871 = vld [vmem:[#allocation3 + $0x18] sm:$0xff]
    %v872 = vld [vmem:[#allocation3 + $0x20] sm:$0xff]
    %v873 = vld [vmem:[#allocation3 + $0x28] sm:$0xff]
    %v874 = vld [vmem:[#allocation3 + $0x30] sm:$0xff]
    %v875 = vld [vmem:[#allocation3 + $0x38] sm:$0xff]
    %vm876 = vcmask 130048
    %v877 = vsel %vm876, %v860, -inf
    %878 = vmax.xlane.f32.xlu0 %v877
    %v879 = vpop.xlane.xlu0 %878
    %v880 = vsel %vm876, %v861, -inf
    %881 = vmax.xlane.f32.xlu0 %v880
    %v882 = vpop.xlane.xlu0 %881
    %v883 = vsel %vm876, %v862, -inf
    %884 = vmax.xlane.f32.xlu0 %v883
    %v885 = vpop.xlane.xlu0 %884
    %v886 = vsel %vm876, %v863, -inf
    %887 = vmax.xlane.f32.xlu0 %v886
    %v888 = vpop.xlane.xlu0 %887
    %v889 = vsel %vm876, %v864, -inf
    %890 = vmax.xlane.f32.xlu0 %v889
    %v891 = vpop.xlane.xlu0 %890
    %v892 = vsel %vm876, %v865, -inf
    %893 = vmax.xlane.f32.xlu0 %v892
    %v894 = vpop.xlane.xlu0 %893
    %v895 = vsel %vm876, %v866, -inf
    %896 = vmax.xlane.f32.xlu0 %v895
    %v897 = vpop.xlane.xlu0 %896
    %v898 = vsel %vm876, %v867, -inf
    %899 = vmax.xlane.f32.xlu0 %v898
    %v900 = vpop.xlane.xlu0 %899
    %v901 = vmax.f32 %v868, %v879
    %v902 = vmax.f32 %v869, %v882
    %v903 = vmax.f32 %v870, %v885
    %v904 = vmax.f32 %v871, %v888
    %v905 = vmax.f32 %v872, %v891
    %v906 = vmax.f32 %v873, %v894
    %v907 = vmax.f32 %v874, %v897
    %v908 = vmax.f32 %v875, %v900
    %v909 = vsub.f32 %v868, %v901
    %v910 = vsub.f32 %v869, %v902
    %v911 = vsub.f32 %v870, %v903
    %v912 = vsub.f32 %v871, %v904
    %v913 = vsub.f32 %v872, %v905
    %v914 = vsub.f32 %v873, %v906
    %v915 = vsub.f32 %v874, %v907
    %v916 = vsub.f32 %v875, %v908
    %v917 = vmul.f32 %v909, 1.442695
    %v918 = vpow.pop %v917
    %v919 = vmul.f32 %v910, 1.442695
    %v920 = vpow.pop %v919
    %v921 = vmul.f32 %v911, 1.442695
    %v922 = vpow.pop %v921
    %v923 = vmul.f32 %v912, 1.442695
    %v924 = vpow.pop %v923
    %v925 = vmul.f32 %v913, 1.442695
    %v926 = vpow.pop %v925
    %v927 = vmul.f32 %v914, 1.442695
    %v928 = vpow.pop %v927
    %v929 = vmul.f32 %v915, 1.442695
    %v930 = vpow.pop %v929
    %v931 = vmul.f32 %v916, 1.442695
    %v932 = vpow.pop %v931
    %934 = vset.pattern.permute.xlu0 0
    %935 = vperm.xlu0 %934, %v901
    %v936 = vpop.permute.xlu0 %935
    %939 = vset.pattern.permute.xlu0 0
    %940 = vperm.xlu0 %939, %v902
    %v941 = vpop.permute.xlu0 %940
    %944 = vset.pattern.permute.xlu0 0
    %945 = vperm.xlu0 %944, %v903
    %v946 = vpop.permute.xlu0 %945
    %949 = vset.pattern.permute.xlu0 0
    %950 = vperm.xlu0 %949, %v904
    %v951 = vpop.permute.xlu0 %950
    %954 = vset.pattern.permute.xlu0 0
    %955 = vperm.xlu0 %954, %v905
    %v956 = vpop.permute.xlu0 %955
    %959 = vset.pattern.permute.xlu0 0
    %960 = vperm.xlu0 %959, %v906
    %v961 = vpop.permute.xlu0 %960
    %964 = vset.pattern.permute.xlu0 0
    %965 = vperm.xlu0 %964, %v907
    %v966 = vpop.permute.xlu0 %965
    %969 = vset.pattern.permute.xlu0 0
    %970 = vperm.xlu0 %969, %v908
    %v971 = vpop.permute.xlu0 %970
    %v973 = vsub.f32 %v860, %v936
    %v974 = vsub.f32 %v861, %v941
    %v975 = vsub.f32 %v862, %v946
    %v976 = vsub.f32 %v863, %v951
    %v977 = vsub.f32 %v864, %v956
    %v978 = vsub.f32 %v865, %v961
    %v979 = vsub.f32 %v866, %v966
    %v980 = vsub.f32 %v867, %v971
    %v981 = vmul.f32 %v973, 1.442695
    %v982 = vpow.pop %v981
    %v983 = vmul.f32 %v974, 1.442695
    %v984 = vpow.pop %v983
    %v985 = vmul.f32 %v975, 1.442695
    %v986 = vpow.pop %v985
    %v987 = vmul.f32 %v976, 1.442695
    %v988 = vpow.pop %v987
    %v989 = vmul.f32 %v977, 1.442695
    %v990 = vpow.pop %v989
    %v991 = vmul.f32 %v978, 1.442695
    %v992 = vpow.pop %v991
    %v993 = vmul.f32 %v979, 1.442695
    %v994 = vpow.pop %v993
    %v995 = vmul.f32 %v980, 1.442695
    %v996 = vpow.pop %v995
    %v997 = vld [vmem:[#allocation4] sm:$0xff]
    %v998 = vld [vmem:[#allocation4 + $0x8] sm:$0xff]
    %v999 = vld [vmem:[#allocation4 + $0x10] sm:$0xff]
    %v1000 = vld [vmem:[#allocation4 + $0x18] sm:$0xff]
    %v1001 = vld [vmem:[#allocation4 + $0x20] sm:$0xff]
    %v1002 = vld [vmem:[#allocation4 + $0x28] sm:$0xff]
    %v1003 = vld [vmem:[#allocation4 + $0x30] sm:$0xff]
    %v1004 = vld [vmem:[#allocation4 + $0x38] sm:$0xff]
    %v1005 = vmul.f32 %v918, %v997
    %v1006 = vmul.f32 %v920, %v998
    %v1007 = vmul.f32 %v922, %v999
    %v1008 = vmul.f32 %v924, %v1000
    %v1009 = vmul.f32 %v926, %v1001
    %v1010 = vmul.f32 %v928, %v1002
    %v1011 = vmul.f32 %v930, %v1003
    %v1012 = vmul.f32 %v932, %v1004
    %v1013 = vsel %vm876, %v982, 0.0
    %1014 = vadd.xlane.f32.xlu0 %v1013
    %v1015 = vpop.xlane.xlu0 %1014
    %v1016 = vsel %vm876, %v984, 0.0
    %1017 = vadd.xlane.f32.xlu0 %v1016
    %v1018 = vpop.xlane.xlu0 %1017
    %v1019 = vsel %vm876, %v986, 0.0
    %1020 = vadd.xlane.f32.xlu0 %v1019
    %v1021 = vpop.xlane.xlu0 %1020
    %v1022 = vsel %vm876, %v988, 0.0
    %1023 = vadd.xlane.f32.xlu0 %v1022
    %v1024 = vpop.xlane.xlu0 %1023
    %v1025 = vsel %vm876, %v990, 0.0
    %1026 = vadd.xlane.f32.xlu0 %v1025
    %v1027 = vpop.xlane.xlu0 %1026
    %v1028 = vsel %vm876, %v992, 0.0
    %1029 = vadd.xlane.f32.xlu0 %v1028
    %v1030 = vpop.xlane.xlu0 %1029
    %v1031 = vsel %vm876, %v994, 0.0
    %1032 = vadd.xlane.f32.xlu0 %v1031
    %v1033 = vpop.xlane.xlu0 %1032
    %v1034 = vsel %vm876, %v996, 0.0
    %1035 = vadd.xlane.f32.xlu0 %v1034
    %v1036 = vpop.xlane.xlu0 %1035
    %v1037 = vadd.f32 %v1005, %v1015
    %v1038 = vadd.f32 %v1006, %v1018
    %v1039 = vadd.f32 %v1007, %v1021
    %v1040 = vadd.f32 %v1008, %v1024
    %v1041 = vadd.f32 %v1009, %v1027
    %v1042 = vadd.f32 %v1010, %v1030
    %v1043 = vadd.f32 %v1011, %v1033
    %v1044 = vadd.f32 %v1012, %v1036
    %vm1045 = vcmask 7168
    %1046 = vst.msk [vmem:[#allocation4] sm:$0xff] %vm1045, %v1037
    %1047 = vst.msk [vmem:[#allocation4 + $0x8] sm:$0xff] %vm1045, %v1038
    %1048 = vst.msk [vmem:[#allocation4 + $0x10] sm:$0xff] %vm1045, %v1039
    %1049 = vst.msk [vmem:[#allocation4 + $0x18] sm:$0xff] %vm1045, %v1040
    %1050 = vst.msk [vmem:[#allocation4 + $0x20] sm:$0xff] %vm1045, %v1041
    %1051 = vst.msk [vmem:[#allocation4 + $0x28] sm:$0xff] %vm1045, %v1042
    %1052 = vst.msk [vmem:[#allocation4 + $0x30] sm:$0xff] %vm1045, %v1043
    %1053 = vst.msk [vmem:[#allocation4 + $0x38] sm:$0xff] %vm1045, %v1044
    %v1054 = vld [vmem:[#allocation5] sm:$0xff]
    %v1055 = vld [vmem:[#allocation5 + $0x8] sm:$0xff]
    %v1056 = vld [vmem:[#allocation5 + $0x10] sm:$0xff]
    %v1057 = vld [vmem:[#allocation5 + $0x18] sm:$0xff]
    %v1058 = vld [vmem:[#allocation5 + $0x20] sm:$0xff]
    %v1059 = vld [vmem:[#allocation5 + $0x28] sm:$0xff]
    %v1060 = vld [vmem:[#allocation5 + $0x30] sm:$0xff]
    %v1061 = vld [vmem:[#allocation5 + $0x38] sm:$0xff]
    %1063 = vset.pattern.permute.xlu0 0
    %1064 = vperm.xlu0 %1063, %v918
    %v1065 = vpop.permute.xlu0 %1064
    %1068 = vset.pattern.permute.xlu0 0
    %1069 = vperm.xlu0 %1068, %v920
    %v1070 = vpop.permute.xlu0 %1069
    %1073 = vset.pattern.permute.xlu0 0
    %1074 = vperm.xlu0 %1073, %v922
    %v1075 = vpop.permute.xlu0 %1074
    %1078 = vset.pattern.permute.xlu0 0
    %1079 = vperm.xlu0 %1078, %v924
    %v1080 = vpop.permute.xlu0 %1079
    %1083 = vset.pattern.permute.xlu0 0
    %1084 = vperm.xlu0 %1083, %v926
    %v1085 = vpop.permute.xlu0 %1084
    %1088 = vset.pattern.permute.xlu0 0
    %1089 = vperm.xlu0 %1088, %v928
    %v1090 = vpop.permute.xlu0 %1089
    %1093 = vset.pattern.permute.xlu0 0
    %1094 = vperm.xlu0 %1093, %v930
    %v1095 = vpop.permute.xlu0 %1094
    %1098 = vset.pattern.permute.xlu0 0
    %1099 = vperm.xlu0 %1098, %v932
    %v1100 = vpop.permute.xlu0 %1099
    %v1102 = vmul.f32 %v1065, %v1054
    %v1103 = vmul.f32 %v1070, %v1055
    %v1104 = vmul.f32 %v1075, %v1056
    %v1105 = vmul.f32 %v1080, %v1057
    %v1106 = vmul.f32 %v1085, %v1058
    %v1107 = vmul.f32 %v1090, %v1059
    %v1108 = vmul.f32 %v1095, %v1060
    %v1109 = vmul.f32 %v1100, %v1061
    %v1110 = vpack.c.bf16 %v982, %v982
    %v1111 = vpack.c.bf16 %v984, %v984
    %v1112 = vpack.c.bf16 %v986, %v986
    %v1113 = vpack.c.bf16 %v988, %v988
    %v1114 = vpack.c.bf16 %v990, %v990
    %v1115 = vpack.c.bf16 %v992, %v992
    %v1116 = vpack.c.bf16 %v994, %v994
    %v1117 = vpack.c.bf16 %v996, %v996
    %v1119 = vsel %vm876, %v1110, 0
    %1121 = vmatprep.subr.bf16.mxu0 0
    %1122 = vmatpush1.bf16.msra.mxu0 %v524
    %1123 = vmatprep.subr.bf16.mxu0 0
    %1124 = vmatpush1.bf16.msra.mxu0 0
    %1125 = vmatprep.subr.bf16.mxu0 0
    %1126 = vmatpush1.bf16.msra.mxu0 0
    %1127 = vmatprep.subr.bf16.mxu0 0
    %1128 = vmatpush1.bf16.msra.mxu0 0
    %1129 = vmatprep.subr.bf16.mxu0 0
    %1130 = vmatpush1.bf16.msra.mxu0 0
    %1131 = vmatprep.subr.bf16.mxu0 0
    %1132 = vmatpush1.bf16.msra.mxu0 0
    %1133 = vmatprep.subr.bf16.mxu0 0
    %1134 = vmatpush1.bf16.msra.mxu0 0
    %1135 = vmatprep.subr.bf16.mxu0 0
    %1136 = vmatpush1.bf16.msra.mxu0 0
    %1137 = vmatprep.subr.bf16.mxu0 0
    %1138 = vmatpush1.bf16.msra.mxu0 0
    %1139 = vmatprep.subr.bf16.mxu0 0
    %1140 = vmatpush1.bf16.msra.mxu0 0
    %1141 = vmatprep.subr.bf16.mxu0 0
    %1142 = vmatpush1.bf16.msra.mxu0 0
    %1143 = vmatprep.subr.bf16.mxu0 0
    %1144 = vmatpush1.bf16.msra.mxu0 0
    %1145 = vmatprep.subr.bf16.mxu0 0
    %1146 = vmatpush1.bf16.msra.mxu0 0
    %1147 = vmatprep.subr.bf16.mxu0 0
    %1148 = vmatpush1.bf16.msra.mxu0 0
    %1149 = vmatprep.subr.bf16.mxu0 0
    %1150 = vmatpush1.bf16.msra.mxu0 0
    %1151 = vmatprep.subr.bf16.mxu0 0
    %1152 = vmatpush1.bf16.msra.mxu0 0
    %1153 = vmatprep.mubr.bf16.mxu0 0
    %1154 = vmatmul.mubr.bf16.gmra.mrb[0].mxu0 %v1119
    %v1155 = vpop.f32.mrb[0].mxu0
    %v1156 = vadd.f32 0.0, %v1155
    %v1157 = vpop.f32.mrb[0].mxu0
    %v1158 = vpop.f32.mrb[0].mxu0
    %v1159 = vpop.f32.mrb[0].mxu0
    %1160 = vdwg.mxu0
    %v1162 = vsel %vm876, %v1111, 0
    %1164 = vmatprep.subr.bf16.mxu0 0
    %1165 = vmatpush1.bf16.msra.mxu0 %v525
    %1166 = vmatprep.subr.bf16.mxu0 0
    %1167 = vmatpush1.bf16.msra.mxu0 0
    %1168 = vmatprep.subr.bf16.mxu0 0
    %1169 = vmatpush1.bf16.msra.mxu0 0
    %1170 = vmatprep.subr.bf16.mxu0 0
    %1171 = vmatpush1.bf16.msra.mxu0 0
    %1172 = vmatprep.subr.bf16.mxu0 0
    %1173 = vmatpush1.bf16.msra.mxu0 0
    %1174 = vmatprep.subr.bf16.mxu0 0
    %1175 = vmatpush1.bf16.msra.mxu0 0
    %1176 = vmatprep.subr.bf16.mxu0 0
    %1177 = vmatpush1.bf16.msra.mxu0 0
    %1178 = vmatprep.subr.bf16.mxu0 0
    %1179 = vmatpush1.bf16.msra.mxu0 0
    %1180 = vmatprep.subr.bf16.mxu0 0
    %1181 = vmatpush1.bf16.msra.mxu0 0
    %1182 = vmatprep.subr.bf16.mxu0 0
    %1183 = vmatpush1.bf16.msra.mxu0 0
    %1184 = vmatprep.subr.bf16.mxu0 0
    %1185 = vmatpush1.bf16.msra.mxu0 0
    %1186 = vmatprep.subr.bf16.mxu0 0
    %1187 = vmatpush1.bf16.msra.mxu0 0
    %1188 = vmatprep.subr.bf16.mxu0 0
    %1189 = vmatpush1.bf16.msra.mxu0 0
    %1190 = vmatprep.subr.bf16.mxu0 0
    %1191 = vmatpush1.bf16.msra.mxu0 0
    %1192 = vmatprep.subr.bf16.mxu0 0
    %1193 = vmatpush1.bf16.msra.mxu0 0
    %1194 = vmatprep.subr.bf16.mxu0 0
    %1195 = vmatpush1.bf16.msra.mxu0 0
    %1196 = vmatprep.mubr.bf16.mxu0 0
    %1197 = vmatmul.mubr.bf16.gmra.mrb[0].mxu0 %v1162
    %v1198 = vpop.f32.mrb[0].mxu0
    %v1199 = vadd.f32 0.0, %v1198
    %v1200 = vpop.f32.mrb[0].mxu0
    %v1201 = vpop.f32.mrb[0].mxu0
    %v1202 = vpop.f32.mrb[0].mxu0
    %1203 = vdwg.mxu0
    %v1205 = vsel %vm876, %v1112, 0
    %1207 = vmatprep.subr.bf16.mxu0 0
    %1208 = vmatpush1.bf16.msra.mxu0 %v526
    %1209 = vmatprep.subr.bf16.mxu0 0
    %1210 = vmatpush1.bf16.msra.mxu0 0
    %1211 = vmatprep.subr.bf16.mxu0 0
    %1212 = vmatpush1.bf16.msra.mxu0 0
    %1213 = vmatprep.subr.bf16.mxu0 0
    %1214 = vmatpush1.bf16.msra.mxu0 0
    %1215 = vmatprep.subr.bf16.mxu0 0
    %1216 = vmatpush1.bf16.msra.mxu0 0
    %1217 = vmatprep.subr.bf16.mxu0 0
    %1218 = vmatpush1.bf16.msra.mxu0 0
    %1219 = vmatprep.subr.bf16.mxu0 0
    %1220 = vmatpush1.bf16.msra.mxu0 0
    %1221 = vmatprep.subr.bf16.mxu0 0
    %1222 = vmatpush1.bf16.msra.mxu0 0
    %1223 = vmatprep.subr.bf16.mxu0 0
    %1224 = vmatpush1.bf16.msra.mxu0 0
    %1225 = vmatprep.subr.bf16.mxu0 0
    %1226 = vmatpush1.bf16.msra.mxu0 0
    %1227 = vmatprep.subr.bf16.mxu0 0
    %1228 = vmatpush1.bf16.msra.mxu0 0
    %1229 = vmatprep.subr.bf16.mxu0 0
    %1230 = vmatpush1.bf16.msra.mxu0 0
    %1231 = vmatprep.subr.bf16.mxu0 0
    %1232 = vmatpush1.bf16.msra.mxu0 0
    %1233 = vmatprep.subr.bf16.mxu0 0
    %1234 = vmatpush1.bf16.msra.mxu0 0
    %1235 = vmatprep.subr.bf16.mxu0 0
    %1236 = vmatpush1.bf16.msra.mxu0 0
    %1237 = vmatprep.subr.bf16.mxu0 0
    %1238 = vmatpush1.bf16.msra.mxu0 0
    %1239 = vmatprep.mubr.bf16.mxu0 0
    %1240 = vmatmul.mubr.bf16.gmra.mrb[0].mxu0 %v1205
    %v1241 = vpop.f32.mrb[0].mxu0
    %v1242 = vadd.f32 0.0, %v1241
    %v1243 = vpop.f32.mrb[0].mxu0
    %v1244 = vpop.f32.mrb[0].mxu0
    %v1245 = vpop.f32.mrb[0].mxu0
    %1246 = vdwg.mxu0
    %v1248 = vsel %vm876, %v1113, 0
    %1250 = vmatprep.subr.bf16.mxu0 0
    %1251 = vmatpush1.bf16.msra.mxu0 %v527
    %1252 = vmatprep.subr.bf16.mxu0 0
    %1253 = vmatpush1.bf16.msra.mxu0 0
    %1254 = vmatprep.subr.bf16.mxu0 0
    %1255 = vmatpush1.bf16.msra.mxu0 0
    %1256 = vmatprep.subr.bf16.mxu0 0
    %1257 = vmatpush1.bf16.msra.mxu0 0
    %1258 = vmatprep.subr.bf16.mxu0 0
    %1259 = vmatpush1.bf16.msra.mxu0 0
    %1260 = vmatprep.subr.bf16.mxu0 0
    %1261 = vmatpush1.bf16.msra.mxu0 0
    %1262 = vmatprep.subr.bf16.mxu0 0
    %1263 = vmatpush1.bf16.msra.mxu0 0
    %1264 = vmatprep.subr.bf16.mxu0 0
    %1265 = vmatpush1.bf16.msra.mxu0 0
    %1266 = vmatprep.subr.bf16.mxu0 0
    %1267 = vmatpush1.bf16.msra.mxu0 0
    %1268 = vmatprep.subr.bf16.mxu0 0
    %1269 = vmatpush1.bf16.msra.mxu0 0
    %1270 = vmatprep.subr.bf16.mxu0 0
    %1271 = vmatpush1.bf16.msra.mxu0 0
    %1272 = vmatprep.subr.bf16.mxu0 0
    %1273 = vmatpush1.bf16.msra.mxu0 0
    %1274 = vmatprep.subr.bf16.mxu0 0
    %1275 = vmatpush1.bf16.msra.mxu0 0
    %1276 = vmatprep.subr.bf16.mxu0 0
    %1277 = vmatpush1.bf16.msra.mxu0 0
    %1278 = vmatprep.subr.bf16.mxu0 0
    %1279 = vmatpush1.bf16.msra.mxu0 0
    %1280 = vmatprep.subr.bf16.mxu0 0
    %1281 = vmatpush1.bf16.msra.mxu0 0
    %1282 = vmatprep.mubr.bf16.mxu0 0
    %1283 = vmatmul.mubr.bf16.gmra.mrb[0].mxu0 %v1248
    %v1284 = vpop.f32.mrb[0].mxu0
    %v1285 = vadd.f32 0.0, %v1284
    %v1286 = vpop.f32.mrb[0].mxu0
    %v1287 = vpop.f32.mrb[0].mxu0
    %v1288 = vpop.f32.mrb[0].mxu0
    %1289 = vdwg.mxu0
    %v1291 = vsel %vm876, %v1114, 0
    %1293 = vmatprep.subr.bf16.mxu0 0
    %1294 = vmatpush1.bf16.msra.mxu0 %v528
    %1295 = vmatprep.subr.bf16.mxu0 0
    %1296 = vmatpush1.bf16.msra.mxu0 0
    %1297 = vmatprep.subr.bf16.mxu0 0
    %1298 = vmatpush1.bf16.msra.mxu0 0
    %1299 = vmatprep.subr.bf16.mxu0 0
    %1300 = vmatpush1.bf16.msra.mxu0 0
    %1301 = vmatprep.subr.bf16.mxu0 0
    %1302 = vmatpush1.bf16.msra.mxu0 0
    %1303 = vmatprep.subr.bf16.mxu0 0
    %1304 = vmatpush1.bf16.msra.mxu0 0
    %1305 = vmatprep.subr.bf16.mxu0 0
    %1306 = vmatpush1.bf16.msra.mxu0 0
    %1307 = vmatprep.subr.bf16.mxu0 0
    %1308 = vmatpush1.bf16.msra.mxu0 0
    %1309 = vmatprep.subr.bf16.mxu0 0
    %1310 = vmatpush1.bf16.msra.mxu0 0
    %1311 = vmatprep.subr.bf16.mxu0 0
    %1312 = vmatpush1.bf16.msra.mxu0 0
    %1313 = vmatprep.subr.bf16.mxu0 0
    %1314 = vmatpush1.bf16.msra.mxu0 0
    %1315 = vmatprep.subr.bf16.mxu0 0
    %1316 = vmatpush1.bf16.msra.mxu0 0
    %1317 = vmatprep.subr.bf16.mxu0 0
    %1318 = vmatpush1.bf16.msra.mxu0 0
    %1319 = vmatprep.subr.bf16.mxu0 0
    %1320 = vmatpush1.bf16.msra.mxu0 0
    %1321 = vmatprep.subr.bf16.mxu0 0
    %1322 = vmatpush1.bf16.msra.mxu0 0
    %1323 = vmatprep.subr.bf16.mxu0 0
    %1324 = vmatpush1.bf16.msra.mxu0 0
    %1325 = vmatprep.mubr.bf16.mxu0 0
    %1326 = vmatmul.mubr.bf16.gmra.mrb[0].mxu0 %v1291
    %v1327 = vpop.f32.mrb[0].mxu0
    %v1328 = vadd.f32 0.0, %v1327
    %v1329 = vpop.f32.mrb[0].mxu0
    %v1330 = vpop.f32.mrb[0].mxu0
    %v1331 = vpop.f32.mrb[0].mxu0
    %1332 = vdwg.mxu0
    %v1334 = vsel %vm876, %v1115, 0
    %1336 = vmatprep.subr.bf16.mxu0 0
    %1337 = vmatpush1.bf16.msra.mxu0 %v529
    %1338 = vmatprep.subr.bf16.mxu0 0
    %1339 = vmatpush1.bf16.msra.mxu0 0
    %1340 = vmatprep.subr.bf16.mxu0 0
    %1341 = vmatpush1.bf16.msra.mxu0 0
    %1342 = vmatprep.subr.bf16.mxu0 0
    %1343 = vmatpush1.bf16.msra.mxu0 0
    %1344 = vmatprep.subr.bf16.mxu0 0
    %1345 = vmatpush1.bf16.msra.mxu0 0
    %1346 = vmatprep.subr.bf16.mxu0 0
    %1347 = vmatpush1.bf16.msra.mxu0 0
    %1348 = vmatprep.subr.bf16.mxu0 0
    %1349 = vmatpush1.bf16.msra.mxu0 0
    %1350 = vmatprep.subr.bf16.mxu0 0
    %1351 = vmatpush1.bf16.msra.mxu0 0
    %1352 = vmatprep.subr.bf16.mxu0 0
    %1353 = vmatpush1.bf16.msra.mxu0 0
    %1354 = vmatprep.subr.bf16.mxu0 0
    %1355 = vmatpush1.bf16.msra.mxu0 0
    %1356 = vmatprep.subr.bf16.mxu0 0
    %1357 = vmatpush1.bf16.msra.mxu0 0
    %1358 = vmatprep.subr.bf16.mxu0 0
    %1359 = vmatpush1.bf16.msra.mxu0 0
    %1360 = vmatprep.subr.bf16.mxu0 0
    %1361 = vmatpush1.bf16.msra.mxu0 0
    %1362 = vmatprep.subr.bf16.mxu0 0
    %1363 = vmatpush1.bf16.msra.mxu0 0
    %1364 = vmatprep.subr.bf16.mxu0 0
    %1365 = vmatpush1.bf16.msra.mxu0 0
    %1366 = vmatprep.subr.bf16.mxu0 0
    %1367 = vmatpush1.bf16.msra.mxu0 0
    %1368 = vmatprep.mubr.bf16.mxu0 0
    %1369 = vmatmul.mubr.bf16.gmra.mrb[0].mxu0 %v1334
    %v1370 = vpop.f32.mrb[0].mxu0
    %v1371 = vadd.f32 0.0, %v1370
    %v1372 = vpop.f32.mrb[0].mxu0
    %v1373 = vpop.f32.mrb[0].mxu0
    %v1374 = vpop.f32.mrb[0].mxu0
    %1375 = vdwg.mxu0
    %v1377 = vsel %vm876, %v1116, 0
    %1379 = vmatprep.subr.bf16.mxu0 0
    %1380 = vmatpush1.bf16.msra.mxu0 %v530
    %1381 = vmatprep.subr.bf16.mxu0 0
    %1382 = vmatpush1.bf16.msra.mxu0 0
    %1383 = vmatprep.subr.bf16.mxu0 0
    %1384 = vmatpush1.bf16.msra.mxu0 0
    %1385 = vmatprep.subr.bf16.mxu0 0
    %1386 = vmatpush1.bf16.msra.mxu0 0
    %1387 = vmatprep.subr.bf16.mxu0 0
    %1388 = vmatpush1.bf16.msra.mxu0 0
    %1389 = vmatprep.subr.bf16.mxu0 0
    %1390 = vmatpush1.bf16.msra.mxu0 0
    %1391 = vmatprep.subr.bf16.mxu0 0
    %1392 = vmatpush1.bf16.msra.mxu0 0
    %1393 = vmatprep.subr.bf16.mxu0 0
    %1394 = vmatpush1.bf16.msra.mxu0 0
    %1395 = vmatprep.subr.bf16.mxu0 0
    %1396 = vmatpush1.bf16.msra.mxu0 0
    %1397 = vmatprep.subr.bf16.mxu0 0
    %1398 = vmatpush1.bf16.msra.mxu0 0
    %1399 = vmatprep.subr.bf16.mxu0 0
    %1400 = vmatpush1.bf16.msra.mxu0 0
    %1401 = vmatprep.subr.bf16.mxu0 0
    %1402 = vmatpush1.bf16.msra.mxu0 0
    %1403 = vmatprep.subr.bf16.mxu0 0
    %1404 = vmatpush1.bf16.msra.mxu0 0
    %1405 = vmatprep.subr.bf16.mxu0 0
    %1406 = vmatpush1.bf16.msra.mxu0 0
    %1407 = vmatprep.subr.bf16.mxu0 0
    %1408 = vmatpush1.bf16.msra.mxu0 0
    %1409 = vmatprep.subr.bf16.mxu0 0
    %1410 = vmatpush1.bf16.msra.mxu0 0
    %1411 = vmatprep.mubr.bf16.mxu0 0
    %1412 = vmatmul.mubr.bf16.gmra.mrb[0].mxu0 %v1377
    %v1413 = vpop.f32.mrb[0].mxu0
    %v1414 = vadd.f32 0.0, %v1413
    %v1415 = vpop.f32.mrb[0].mxu0
    %v1416 = vpop.f32.mrb[0].mxu0
    %v1417 = vpop.f32.mrb[0].mxu0
    %1418 = vdwg.mxu0
    %v1420 = vsel %vm876, %v1117, 0
    %1422 = vmatprep.subr.bf16.mxu0 0
    %1423 = vmatpush1.bf16.msra.mxu0 %v531
    %1424 = vmatprep.subr.bf16.mxu0 0
    %1425 = vmatpush1.bf16.msra.mxu0 0
    %1426 = vmatprep.subr.bf16.mxu0 0
    %1427 = vmatpush1.bf16.msra.mxu0 0
    %1428 = vmatprep.subr.bf16.mxu0 0
    %1429 = vmatpush1.bf16.msra.mxu0 0
    %1430 = vmatprep.subr.bf16.mxu0 0
    %1431 = vmatpush1.bf16.msra.mxu0 0
    %1432 = vmatprep.subr.bf16.mxu0 0
    %1433 = vmatpush1.bf16.msra.mxu0 0
    %1434 = vmatprep.subr.bf16.mxu0 0
    %1435 = vmatpush1.bf16.msra.mxu0 0
    %1436 = vmatprep.subr.bf16.mxu0 0
    %1437 = vmatpush1.bf16.msra.mxu0 0
    %1438 = vmatprep.subr.bf16.mxu0 0
    %1439 = vmatpush1.bf16.msra.mxu0 0
    %1440 = vmatprep.subr.bf16.mxu0 0
    %1441 = vmatpush1.bf16.msra.mxu0 0
    %1442 = vmatprep.subr.bf16.mxu0 0
    %1443 = vmatpush1.bf16.msra.mxu0 0
    %1444 = vmatprep.subr.bf16.mxu0 0
    %1445 = vmatpush1.bf16.msra.mxu0 0
    %1446 = vmatprep.subr.bf16.mxu0 0
    %1447 = vmatpush1.bf16.msra.mxu0 0
    %1448 = vmatprep.subr.bf16.mxu0 0
    %1449 = vmatpush1.bf16.msra.mxu0 0
    %1450 = vmatprep.subr.bf16.mxu0 0
    %1451 = vmatpush1.bf16.msra.mxu0 0
    %1452 = vmatprep.subr.bf16.mxu0 0
    %1453 = vmatpush1.bf16.msra.mxu0 0
    %1454 = vmatprep.mubr.bf16.mxu0 0
    %1455 = vmatmul.mubr.bf16.gmra.mrb[0].mxu0 %v1420
    %v1456 = vpop.f32.mrb[0].mxu0
    %v1457 = vadd.f32 0.0, %v1456
    %v1458 = vpop.f32.mrb[0].mxu0
    %v1459 = vpop.f32.mrb[0].mxu0
    %v1460 = vpop.f32.mrb[0].mxu0
    %1461 = vdwg.mxu0
    %v1462 = vadd.f32 %v1102, %v1156
    %v1463 = vadd.f32 %v1103, %v1199
    %v1464 = vadd.f32 %v1104, %v1242
    %v1465 = vadd.f32 %v1105, %v1285
    %v1466 = vadd.f32 %v1106, %v1328
    %v1467 = vadd.f32 %v1107, %v1371
    %v1468 = vadd.f32 %v1108, %v1414
    %v1469 = vadd.f32 %v1109, %v1457
    %1470 = vst [vmem:[#allocation5] sm:$0xff] %v1462
    %1471 = vst [vmem:[#allocation5 + $0x8] sm:$0xff] %v1463
    %1472 = vst [vmem:[#allocation5 + $0x10] sm:$0xff] %v1464
    %1473 = vst [vmem:[#allocation5 + $0x18] sm:$0xff] %v1465
    %1474 = vst [vmem:[#allocation5 + $0x20] sm:$0xff] %v1466
    %1475 = vst [vmem:[#allocation5 + $0x28] sm:$0xff] %v1467
    %1476 = vst [vmem:[#allocation5 + $0x30] sm:$0xff] %v1468
    %1477 = vst [vmem:[#allocation5 + $0x38] sm:$0xff] %v1469
    %1478 = vst.msk [vmem:[#allocation3] sm:$0xff] %vm1045, %v901
    %1479 = vst.msk [vmem:[#allocation3 + $0x8] sm:$0xff] %vm1045, %v902
    %1480 = vst.msk [vmem:[#allocation3 + $0x10] sm:$0xff] %vm1045, %v903
    %1481 = vst.msk [vmem:[#allocation3 + $0x18] sm:$0xff] %vm1045, %v904
    %1482 = vst.msk [vmem:[#allocation3 + $0x20] sm:$0xff] %vm1045, %v905
    %1483 = vst.msk [vmem:[#allocation3 + $0x28] sm:$0xff] %vm1045, %v906
    %1484 = vst.msk [vmem:[#allocation3 + $0x30] sm:$0xff] %vm1045, %v907
    %1485 = vst.msk [vmem:[#allocation3 + $0x38] sm:$0xff] %vm1045, %v908
    // Predicated region
    $region46: #{tpu_custom_call.1} parent=1 // pred_check
      %p1486 = pneg %p90
    $region47: #{tpu_custom_call.1} parent=1 // pred_check_branch
      %1488 = sbr.rel (%p1486) target = $region49
    $region48: #{tpu_custom_call.1} parent=1 // pred_region
      %v1489 = vld [vmem:[#allocation5] sm:$0xff]
      %v1490 = vld [vmem:[#allocation5 + $0x8] sm:$0xff]
      %v1491 = vld [vmem:[#allocation5 + $0x10] sm:$0xff]
      %v1492 = vld [vmem:[#allocation5 + $0x18] sm:$0xff]
      %v1493 = vld [vmem:[#allocation5 + $0x20] sm:$0xff]
      %v1494 = vld [vmem:[#allocation5 + $0x28] sm:$0xff]
      %v1495 = vld [vmem:[#allocation5 + $0x30] sm:$0xff]
      %v1496 = vld [vmem:[#allocation5 + $0x38] sm:$0xff]
      %v1497 = vld [vmem:[#allocation4] sm:$0xff]
      %v1498 = vld [vmem:[#allocation4 + $0x8] sm:$0xff]
      %v1499 = vld [vmem:[#allocation4 + $0x10] sm:$0xff]
      %v1500 = vld [vmem:[#allocation4 + $0x18] sm:$0xff]
      %v1501 = vld [vmem:[#allocation4 + $0x20] sm:$0xff]
      %v1502 = vld [vmem:[#allocation4 + $0x28] sm:$0xff]
      %v1503 = vld [vmem:[#allocation4 + $0x30] sm:$0xff]
      %v1504 = vld [vmem:[#allocation4 + $0x38] sm:$0xff]
      %1506 = vset.pattern.permute.xlu0 0
      %1507 = vperm.xlu0 %1506, %v1497
      %v1508 = vpop.permute.xlu0 %1507
      %1511 = vset.pattern.permute.xlu0 0
      %1512 = vperm.xlu0 %1511, %v1498
      %v1513 = vpop.permute.xlu0 %1512
      %1516 = vset.pattern.permute.xlu0 0
      %1517 = vperm.xlu0 %1516, %v1499
      %v1518 = vpop.permute.xlu0 %1517
      %1521 = vset.pattern.permute.xlu0 0
      %1522 = vperm.xlu0 %1521, %v1500
      %v1523 = vpop.permute.xlu0 %1522
      %1526 = vset.pattern.permute.xlu0 0
      %1527 = vperm.xlu0 %1526, %v1501
      %v1528 = vpop.permute.xlu0 %1527
      %1531 = vset.pattern.permute.xlu0 0
      %1532 = vperm.xlu0 %1531, %v1502
      %v1533 = vpop.permute.xlu0 %1532
      %1536 = vset.pattern.permute.xlu0 0
      %1537 = vperm.xlu0 %1536, %v1503
      %v1538 = vpop.permute.xlu0 %1537
      %1541 = vset.pattern.permute.xlu0 0
      %1542 = vperm.xlu0 %1541, %v1504
      %v1543 = vpop.permute.xlu0 %1542
      %v1545 = vrcp.pop %v1508
      %v1546 = vmul.f32 %v1489, %v1545
      %v1547 = vrcp.pop %v1513
      %v1548 = vmul.f32 %v1490, %v1547
      %v1549 = vrcp.pop %v1518
      %v1550 = vmul.f32 %v1491, %v1549
      %v1551 = vrcp.pop %v1523
      %v1552 = vmul.f32 %v1492, %v1551
      %v1553 = vrcp.pop %v1528
      %v1554 = vmul.f32 %v1493, %v1553
      %v1555 = vrcp.pop %v1533
      %v1556 = vmul.f32 %v1494, %v1555
      %v1557 = vrcp.pop %v1538
      %v1558 = vmul.f32 %v1495, %v1557
      %v1559 = vrcp.pop %v1543
      %v1560 = vmul.f32 %v1496, %v1559
      %1561 = vst [vmem:[#allocation15] sm:$0xff] %v1546
      %1562 = vst [vmem:[#allocation15 + $0x8] sm:$0xff] %v1548
      %1563 = vst [vmem:[#allocation15 + $0x10] sm:$0xff] %v1550
      %1564 = vst [vmem:[#allocation15 + $0x18] sm:$0xff] %v1552
      %1565 = vst [vmem:[#allocation15 + $0x20] sm:$0xff] %v1554
      %1566 = vst [vmem:[#allocation15 + $0x28] sm:$0xff] %v1556
      %1567 = vst [vmem:[#allocation15 + $0x30] sm:$0xff] %v1558
      %1568 = vst [vmem:[#allocation15 + $0x38] sm:$0xff] %v1560
    $region49: #{tpu_custom_call.1} parent=1 // pred_fallthru
      _
    // Predicated region
    $region50: #{tpu_custom_call.1} parent=1 // pred_check
      _
    $region51: #{tpu_custom_call.1} parent=1 // pred_check_branch
      %1570 = sbr.rel (0) target = $region53
    $region52: #{tpu_custom_call.1} parent=1 // pred_region
      %s1572 = ssub.s32 1024, 1024
      %1573 = vsyncadd [#allocation8], %s1572
      %s1574 = sshll.u32 [#allocation15], 4
      %s1575 = int_to_ptr.vmem [resolvable:$true] %s1574
      %1580 = dma.vmem_to_hbm [thread:$0]  %s1575, 1024, %s5, [#allocation8], 128, 128, 8
    $region53: #{tpu_custom_call.1} parent=1 // pred_fallthru
      _
    // Predicated region
    $region54: #{tpu_custom_call.1} parent=1 // pred_check
      _
    $region55: #{tpu_custom_call.1} parent=1 // pred_check_branch
      %1582 = sbr.rel (0) target = $region57
    $region56: #{tpu_custom_call.1} parent=1 // pred_region
      %1583 = dma.done [#allocation8], 1024
    $region57: #{tpu_custom_call.1} parent=1 // pred_fallthru
      _
    %1584 = vsyncpa [#allocation7], 1
    %1585 = vsyncpa [#allocation10], 1
    %1586 = vsyncpa [#allocation13], 1
    %1587 = vsyncpa [#allocation8], 1

</llo_original>
